<compile_context>
chip_gen: v5e
topology: v5e:2x2
jax: 0.10.0
libtpu: 0.0.40
codegen_flags: <defaults>
</compile_context>

<pallas_src>
import jax
import jax.numpy as jnp
import numpy as np
from jax.experimental import pallas as pl
from jax.experimental.pallas import tpu as pltpu


def _downsample_kernel(x_ref, w_ref, b_ref, o_ref, slab_ref):
    """One output-row tile of the strided 3x3 conv as a single K=9C matmul.

    x_ref:    (1, TH, 6*(Wo+1), C) bf16; row block (2*kh + kw%2)*(Wo+1)+j holds
              padded input pixel (2*ho + kh, 2*j + kw%2).
    w_ref:    (9*Cs, Coutp) bf16; row index (3*kh + kw)*Cs + ci.
    b_ref:    (1, Coutp) f32.
    o_ref:    (1, TH, Wo, Coutp) bf16.
    slab_ref: (TH*Wo, 9*Cs) bf16 scratch -- im2col patch slab built in VMEM.
    """
    th, wo, coutp = o_ref.shape[1], o_ref.shape[2], o_ref.shape[3]
    cin = x_ref.shape[3]
    wo1 = x_ref.shape[2] // 6          # = Wo + 1
    cs = w_ref.shape[0] // 9           # lane-aligned per-tap channel stride

    if cs != cin:
        # Lane-padding columns are never written by the tap stores below;
        # zero them so the (zero) weight rows see 0 rather than stale VMEM.
        slab_ref[...] = jnp.zeros(slab_ref.shape, slab_ref.dtype)

    # Build the (TH*Wo, 9*Cs) patch slab: one small relayout copy per tap
    # (these relayouts were implicit in the old per-tap reshapes anyway).
    for kh in range(3):
        for kw in range(3):
            plane = 2 * kh + (kw % 2)        # row-tap / column-parity plane
            row0 = plane * wo1 + kw // 2     # column offset inside the plane
            tap = x_ref[0, :, pl.ds(row0, wo), :].reshape(th * wo, cin)
            t = 3 * kh + kw
            slab_ref[:, t * cs:t * cs + cin] = tap

    # Single MXU matmul, f32 accumulation, f32 bias add, bf16 lane-dense store.
    acc = jnp.dot(slab_ref[...], w_ref[...], preferred_element_type=jnp.float32)
    acc = acc + b_ref[...]
    o_ref[0] = acc.reshape(th, wo, coutp).astype(o_ref.dtype)


def _vmem_capacity_bytes():
    """Generation-aware VMEM size (v5e/v6e: 128 MiB, v7x: 64 MiB per core)."""
    try:
        return int(pltpu.get_tpu_info().vmem_capacity_bytes)
    except Exception:
        return 64 << 20   # conservative fallback (v7x per-core)


def _choose_tile_rows(N, Ho, Wo, C, Cs, Coutp, vmem_cap):
    """Pick TH (output rows per grid step) under a per-generation VMEM budget."""
    budget = (vmem_cap * 3) // 4                   # max VMEM we will request
    target_rows = 1024 if vmem_cap >= (96 << 20) else 512

    th = max(1, min(Ho, target_rows // max(Wo, 1)))
    if N == 1:                                     # keep >= 2 grid cells (v7x dual TC)
        th = min(th, max(1, (Ho + 1) // 2))

    def need(t):                                   # double-buffered blocks + scratch
        xb = t * 6 * (Wo + 1) * C * 2              # bf16 input block
        wb = 9 * Cs * Coutp * 2                    # resident bf16 weights
        bb = Coutp * 4                             # f32 bias
        ob = t * Wo * Coutp * 2                    # bf16 output block
        slab = t * Wo * 9 * Cs * 2                 # scratch patch slab
        accf = t * Wo * Coutp * 4                  # f32 matmul result
        return 2 * (xb + wb + bb + ob) + slab + accf

    while th > 1 and need(th) > budget:
        th = (th + 1) // 2

    step = 8 // int(np.gcd(Wo, 8))                 # make M = TH*Wo a multiple of 8
    if step > 1 and th >= step:
        th = (th // step) * step
    return th, need(th), budget


@jax.jit
def downsample_forward(x_nchw, w_oihw, bias):
    """Matches Downsample.forward: pad (0,1,0,1) then Conv2d(k=3, s=2, p=0)."""
    N, C, H, W = x_nchw.shape
    Cout, Cin, KH, KW = w_oihw.shape
    assert Cin == C and KH == 3 and KW == 3
    Ho = (H - 2) // 2 + 1
    Wo = (W - 2) // 2 + 1
    Coutp = ((Cout + 127) // 128) * 128            # lane-dense output channels
    Cs = C if C % 128 == 0 else ((C // 128) + 1) * 128   # lane-aligned tap stride

    # ---- host-side layout prep (fused XLA pass + metadata reshapes) --------
    x = jnp.transpose(x_nchw, (0, 2, 3, 1)).astype(jnp.bfloat16)   # NHWC bf16
    Hp = 2 * Ho + 1                     # covers torch's high-side pad row
    Wp = 2 * (Wo + 1)                   # even width -> exact parity split
    x = jnp.pad(x, ((0, 0), (0, Hp - H), (0, Wp - W), (0, 0)))

    # Row taps (input row 2*ho + kh) and column-parity planes:
    #   xt[n, ho, (2*kh + p)*(Wo+1) + j, c] = x_pad[n, 2*ho + kh, 2*j + p, c]
    rows = jnp.stack([x[:, kh:kh + 2 * Ho:2] for kh in range(3)], axis=2)
    xt = rows.reshape(N, Ho, 3, Wo + 1, 2, C)
    xt = jnp.transpose(xt, (0, 1, 2, 4, 3, 5)).reshape(N, Ho, 6 * (Wo + 1), C)

    # Weights (Cout, Cin, kh, kw) -> (9*Cs, Coutp): a single K = 9C matmul.
    w9 = jnp.transpose(w_oihw, (2, 3, 1, 0)).reshape(9, C, Cout).astype(jnp.bfloat16)
    b2 = bias.astype(jnp.float32).reshape(1, Cout)
    if Cs != C:
        w9 = jnp.pad(w9, ((0, 0), (0, Cs - C), (0, 0)))
    if Coutp != Cout:
        w9 = jnp.pad(w9, ((0, 0), (0, 0), (0, Coutp - Cout)))
        b2 = jnp.pad(b2, ((0, 0), (0, Coutp - Cout)))
    w9 = w9.reshape(9 * Cs, Coutp)

    # ---- tiling / VMEM budget ----------------------------------------------
    vmem_cap = _vmem_capacity_bytes()
    TH, need, budget = _choose_tile_rows(N, Ho, Wo, C, Cs, Coutp, vmem_cap)

    Hop = -(-Ho // TH) * TH             # pad Ho -> no ragged row tiles
    if Hop != Ho:
        xt = jnp.pad(xt, ((0, 0), (0, Hop - Ho), (0, 0), (0, 0)))
    grid = (N, Hop // TH)

    vmem_limit = int(min(budget, max(need + (4 << 20), 16 << 20)))

    cost = pl.CostEstimate(
        flops=2 * N * Ho * Wo * 9 * C * Cout,
        transcendentals=0,
        bytes_accessed=(N * Hop * 6 * (Wo + 1) * C * 2
                        + 9 * Cs * Coutp * 2 + Coutp * 4
                        + N * Hop * Wo * Coutp * 2),
    )

    out = pl.pallas_call(
        _downsample_kernel,
        out_shape=jax.ShapeDtypeStruct((N, Hop, Wo, Coutp), jnp.bfloat16),
        grid=grid,
        in_specs=[
            pl.BlockSpec((1, TH, 6 * (Wo + 1), C), lambda n, i: (n, i, 0, 0)),
            # Constant index maps -> weights / bias stay VMEM-resident.
            pl.BlockSpec((9 * Cs, Coutp), lambda n, i: (0, 0)),
            pl.BlockSpec((1, Coutp), lambda n, i: (0, 0)),
        ],
        out_specs=pl.BlockSpec((1, TH, Wo, Coutp), lambda n, i: (n, i, 0, 0)),
        scratch_shapes=[pltpu.VMEM((TH * Wo, 9 * Cs), jnp.bfloat16)],
        compiler_params=pltpu.CompilerParams(
            dimension_semantics=("parallel", "parallel"),
            vmem_limit_bytes=vmem_limit,
        ),
        cost_estimate=cost,
    )(xt, w9, b2)

    out = out[:, :Ho, :, :Cout]                           # drop row/lane padding
    return jnp.transpose(out, (0, 3, 1, 2)).astype(jnp.float32)   # NCHW f32


def _reference(x_nchw, w_oihw, bias):
    """Same math (bf16 operands, f32 accumulation) via XLA conv."""
    y = jax.lax.conv_general_dilated(
        x_nchw.astype(jnp.bfloat16), w_oihw.astype(jnp.bfloat16),
        window_strides=(2, 2),
        padding=[(0, 1), (0, 1)],
        dimension_numbers=("NCHW", "OIHW", "NCHW"),
        preferred_element_type=jnp.float32,
    )
    return y + bias.astype(jnp.float32).reshape(1, -1, 1, 1)


if __name__ == "__main__":
    key = jax.random.PRNGKey(0)
    k_x, k_w, k_b = jax.random.split(key, 3)

    N, C, H, W = 2, 4, 16, 16
    x = jax.random.normal(k_x, (N, C, H, W), dtype=jnp.float32)

    # Deterministic Conv2d(C, C, k=3) parameters (synthetic).
    fan_in = C * 3 * 3
    bound = 1.0 / np.sqrt(fan_in)
    w = jax.random.uniform(k_w, (C, C, 3, 3), jnp.float32, -bound, bound)
    b = jax.random.uniform(k_b, (C,), jnp.float32, -bound, bound)

    out = jax.block_until_ready(downsample_forward(x, w, b))
    ref = jax.block_until_ready(_reference(x, w, b))

    assert out.shape == (N, C, 8, 8), out.shape
    # Kernel stores its result in bf16 (per perf feedback), so allow one bf16
    # rounding of O(1) values on top of the bf16-operand reference.
    np.testing.assert_allclose(np.asarray(out), np.asarray(ref),
                               rtol=1e-2, atol=1e-2)
    print("KERNEL_OK")
</pallas_src>

<mosaic_0001>
module attributes {stable_mosaic.version = 11 : i64} {
  func.func @_downsample_kernel(%arg0: i32, %arg1: i32, %arg2: memref<1x8x54x4xbf16, #tpu.memory_space<vmem>>, %arg3: memref<1152x128xbf16, #tpu.memory_space<vmem>>, %arg4: memref<1x128xf32, #tpu.memory_space<vmem>>, %arg5: memref<1x8x8x128xbf16, #tpu.memory_space<vmem>>, %arg6: memref<64x1152xbf16, #tpu.memory_space<vmem>>) attributes {dimension_semantics = [#tpu.dimension_semantics<parallel>, #tpu.dimension_semantics<parallel>], iteration_bounds = array<i64: 2, 1>, scalar_prefetch = 0 : i64, scratch_operands = 1 : i64, tpu.core_type = #tpu.core_type<tc>, window_params = [{transform_indices = @transform_0, window_bounds = array<i64: 1, 8, 54, 4>}, {pipeline_mode = #tpu.pipeline_mode<synchronous>, transform_indices = @transform_1, window_bounds = array<i64: 1152, 128>}, {pipeline_mode = #tpu.pipeline_mode<synchronous>, transform_indices = @transform_2, window_bounds = array<i64: 1, 128>}, {transform_indices = @transform_3, window_bounds = array<i64: 1, 8, 8, 128>}]} {
    %cst = arith.constant 0.000000e+00 : bf16
    %0 = vector.broadcast %cst : bf16 to vector<64x1152xbf16>
    %c0 = arith.constant 0 : index
    %c0_0 = arith.constant 0 : index
    %1 = vector.load %arg6[%c0, %c0_0] : memref<64x1152xbf16, #tpu.memory_space<vmem>>, vector<64x1152xbf16>
    tpu.vector_store %arg6[%c0, %c0_0], %0 {strides = array<i32>} : memref<64x1152xbf16, #tpu.memory_space<vmem>>, vector<64x1152xbf16>,
    %c0_1 = arith.constant 0 : index
    %c0_2 = arith.constant 0 : index
    %c0_3 = arith.constant 0 : index
    %c0_4 = arith.constant 0 : index
    %2 = vector.load %arg2[%c0_1, %c0_2, %c0_3, %c0_4] : memref<1x8x54x4xbf16, #tpu.memory_space<vmem>>, vector<1x8x8x4xbf16>
    %3 = vector.shape_cast %2 : vector<1x8x8x4xbf16> to vector<8x8x4xbf16>
    %4 = vector.shape_cast %3 : vector<8x8x4xbf16> to vector<64x4xbf16>
    %c0_5 = arith.constant 0 : index
    %c0_6 = arith.constant 0 : index
    %5 = vector.load %arg6[%c0_5, %c0_6] : memref<64x1152xbf16, #tpu.memory_space<vmem>>, vector<64x4xbf16>
    tpu.vector_store %arg6[%c0_5, %c0_6], %4 {strides = array<i32>} : memref<64x1152xbf16, #tpu.memory_space<vmem>>, vector<64x4xbf16>,
    %c0_7 = arith.constant 0 : index
    %c0_8 = arith.constant 0 : index
    %c9 = arith.constant 9 : index
    %c0_9 = arith.constant 0 : index
    %6 = vector.load %arg2[%c0_7, %c0_8, %c9, %c0_9] : memref<1x8x54x4xbf16, #tpu.memory_space<vmem>>, vector<1x8x8x4xbf16>
    %7 = vector.shape_cast %6 : vector<1x8x8x4xbf16> to vector<8x8x4xbf16>
    %8 = vector.shape_cast %7 : vector<8x8x4xbf16> to vector<64x4xbf16>
    %c0_10 = arith.constant 0 : index
    %c128 = arith.constant 128 : index
    %9 = vector.load %arg6[%c0_10, %c128] : memref<64x1152xbf16, #tpu.memory_space<vmem>>, vector<64x4xbf16>
    tpu.vector_store %arg6[%c0_10, %c128], %8 {strides = array<i32>} : memref<64x1152xbf16, #tpu.memory_space<vmem>>, vector<64x4xbf16>,
    %c0_11 = arith.constant 0 : index
    %c0_12 = arith.constant 0 : index
    %c1 = arith.constant 1 : index
    %c0_13 = arith.constant 0 : index
    %10 = vector.load %arg2[%c0_11, %c0_12, %c1, %c0_13] : memref<1x8x54x4xbf16, #tpu.memory_space<vmem>>, vector<1x8x8x4xbf16>
    %11 = vector.shape_cast %10 : vector<1x8x8x4xbf16> to vector<8x8x4xbf16>
    %12 = vector.shape_cast %11 : vector<8x8x4xbf16> to vector<64x4xbf16>
    %c0_14 = arith.constant 0 : index
    %c256 = arith.constant 256 : index
    %13 = vector.load %arg6[%c0_14, %c256] : memref<64x1152xbf16, #tpu.memory_space<vmem>>, vector<64x4xbf16>
    tpu.vector_store %arg6[%c0_14, %c256], %12 {strides = array<i32>} : memref<64x1152xbf16, #tpu.memory_space<vmem>>, vector<64x4xbf16>,
    %c0_15 = arith.constant 0 : index
    %c0_16 = arith.constant 0 : index
    %c18 = arith.constant 18 : index
    %c0_17 = arith.constant 0 : index
    %14 = vector.load %arg2[%c0_15, %c0_16, %c18, %c0_17] : memref<1x8x54x4xbf16, #tpu.memory_space<vmem>>, vector<1x8x8x4xbf16>
    %15 = vector.shape_cast %14 : vector<1x8x8x4xbf16> to vector<8x8x4xbf16>
    %16 = vector.shape_cast %15 : vector<8x8x4xbf16> to vector<64x4xbf16>
    %c0_18 = arith.constant 0 : index
    %c384 = arith.constant 384 : index
    %17 = vector.load %arg6[%c0_18, %c384] : memref<64x1152xbf16, #tpu.memory_space<vmem>>, vector<64x4xbf16>
    tpu.vector_store %arg6[%c0_18, %c384], %16 {strides = array<i32>} : memref<64x1152xbf16, #tpu.memory_space<vmem>>, vector<64x4xbf16>,
    %c0_19 = arith.constant 0 : index
    %c0_20 = arith.constant 0 : index
    %c27 = arith.constant 27 : index
    %c0_21 = arith.constant 0 : index
    %18 = vector.load %arg2[%c0_19, %c0_20, %c27, %c0_21] : memref<1x8x54x4xbf16, #tpu.memory_space<vmem>>, vector<1x8x8x4xbf16>
    %19 = vector.shape_cast %18 : vector<1x8x8x4xbf16> to vector<8x8x4xbf16>
    %20 = vector.shape_cast %19 : vector<8x8x4xbf16> to vector<64x4xbf16>
    %c0_22 = arith.constant 0 : index
    %c512 = arith.constant 512 : index
    %21 = vector.load %arg6[%c0_22, %c512] : memref<64x1152xbf16, #tpu.memory_space<vmem>>, vector<64x4xbf16>
    tpu.vector_store %arg6[%c0_22, %c512], %20 {strides = array<i32>} : memref<64x1152xbf16, #tpu.memory_space<vmem>>, vector<64x4xbf16>,
    %c0_23 = arith.constant 0 : index
    %c0_24 = arith.constant 0 : index
    %c19 = arith.constant 19 : index
    %c0_25 = arith.constant 0 : index
    %22 = vector.load %arg2[%c0_23, %c0_24, %c19, %c0_25] : memref<1x8x54x4xbf16, #tpu.memory_space<vmem>>, vector<1x8x8x4xbf16>
    %23 = vector.shape_cast %22 : vector<1x8x8x4xbf16> to vector<8x8x4xbf16>
    %24 = vector.shape_cast %23 : vector<8x8x4xbf16> to vector<64x4xbf16>
    %c0_26 = arith.constant 0 : index
    %c640 = arith.constant 640 : index
    %25 = vector.load %arg6[%c0_26, %c640] : memref<64x1152xbf16, #tpu.memory_space<vmem>>, vector<64x4xbf16>
    tpu.vector_store %arg6[%c0_26, %c640], %24 {strides = array<i32>} : memref<64x1152xbf16, #tpu.memory_space<vmem>>, vector<64x4xbf16>,
    %c0_27 = arith.constant 0 : index
    %c0_28 = arith.constant 0 : index
    %c36 = arith.constant 36 : index
    %c0_29 = arith.constant 0 : index
    %26 = vector.load %arg2[%c0_27, %c0_28, %c36, %c0_29] : memref<1x8x54x4xbf16, #tpu.memory_space<vmem>>, vector<1x8x8x4xbf16>
    %27 = vector.shape_cast %26 : vector<1x8x8x4xbf16> to vector<8x8x4xbf16>
    %28 = vector.shape_cast %27 : vector<8x8x4xbf16> to vector<64x4xbf16>
    %c0_30 = arith.constant 0 : index
    %c768 = arith.constant 768 : index
    %29 = vector.load %arg6[%c0_30, %c768] : memref<64x1152xbf16, #tpu.memory_space<vmem>>, vector<64x4xbf16>
    tpu.vector_store %arg6[%c0_30, %c768], %28 {strides = array<i32>} : memref<64x1152xbf16, #tpu.memory_space<vmem>>, vector<64x4xbf16>,
    %c0_31 = arith.constant 0 : index
    %c0_32 = arith.constant 0 : index
    %c45 = arith.constant 45 : index
    %c0_33 = arith.constant 0 : index
    %30 = vector.load %arg2[%c0_31, %c0_32, %c45, %c0_33] : memref<1x8x54x4xbf16, #tpu.memory_space<vmem>>, vector<1x8x8x4xbf16>
    %31 = vector.shape_cast %30 : vector<1x8x8x4xbf16> to vector<8x8x4xbf16>
    %32 = vector.shape_cast %31 : vector<8x8x4xbf16> to vector<64x4xbf16>
    %c0_34 = arith.constant 0 : index
    %c896 = arith.constant 896 : index
    %33 = vector.load %arg6[%c0_34, %c896] : memref<64x1152xbf16, #tpu.memory_space<vmem>>, vector<64x4xbf16>
    tpu.vector_store %arg6[%c0_34, %c896], %32 {strides = array<i32>} : memref<64x1152xbf16, #tpu.memory_space<vmem>>, vector<64x4xbf16>,
    %c0_35 = arith.constant 0 : index
    %c0_36 = arith.constant 0 : index
    %c37 = arith.constant 37 : index
    %c0_37 = arith.constant 0 : index
    %34 = vector.load %arg2[%c0_35, %c0_36, %c37, %c0_37] : memref<1x8x54x4xbf16, #tpu.memory_space<vmem>>, vector<1x8x8x4xbf16>
    %35 = vector.shape_cast %34 : vector<1x8x8x4xbf16> to vector<8x8x4xbf16>
    %36 = vector.shape_cast %35 : vector<8x8x4xbf16> to vector<64x4xbf16>
    %c0_38 = arith.constant 0 : index
    %c1024 = arith.constant 1024 : index
    %37 = vector.load %arg6[%c0_38, %c1024] : memref<64x1152xbf16, #tpu.memory_space<vmem>>, vector<64x4xbf16>
    tpu.vector_store %arg6[%c0_38, %c1024], %36 {strides = array<i32>} : memref<64x1152xbf16, #tpu.memory_space<vmem>>, vector<64x4xbf16>,
    %c0_39 = arith.constant 0 : index
    %c0_40 = arith.constant 0 : index
    %38 = vector.load %arg6[%c0_39, %c0_40] : memref<64x1152xbf16, #tpu.memory_space<vmem>>, vector<64x1152xbf16>
    %c0_41 = arith.constant 0 : index
    %c0_42 = arith.constant 0 : index
    %39 = vector.load %arg3[%c0_41, %c0_42] : memref<1152x128xbf16, #tpu.memory_space<vmem>>, vector<1152x128xbf16>
    %cst_43 = arith.constant dense<0.000000e+00> : vector<64x128xf32>
    %40 = tpu.matmul %38, %39, %cst_43 {dimension_numbers = #tpu.dot_dimension_numbers<[1], [0], [0], [1], [0, 0, 1, 1], [], []>} : vector<64x1152xbf16>, vector<1152x128xbf16>, vector<64x128xf32> -> vector<64x128xf32>
    %c0_44 = arith.constant 0 : index
    %c0_45 = arith.constant 0 : index
    %41 = vector.load %arg4[%c0_44, %c0_45] : memref<1x128xf32, #tpu.memory_space<vmem>>, vector<1x128xf32>
    %42 = vector.broadcast %41 : vector<1x128xf32> to vector<64x128xf32>
    %43 = arith.addf %40, %42 : vector<64x128xf32>
    %44 = vector.shape_cast %43 : vector<64x128xf32> to vector<8x8x128xf32>
    %45 = arith.truncf %44 : vector<8x8x128xf32> to vector<8x8x128xbf16>
    %c0_46 = arith.constant 0 : index
    %c0_47 = arith.constant 0 : index
    %c0_48 = arith.constant 0 : index
    %c0_49 = arith.constant 0 : index
    %46 = vector.load %arg5[%c0_46, %c0_47, %c0_48, %c0_49] : memref<1x8x8x128xbf16, #tpu.memory_space<vmem>>, vector<1x8x8x128xbf16>
    %47 = vector.shape_cast %46 : vector<1x8x8x128xbf16> to vector<8x8x128xbf16>
    %48 = vector.shape_cast %45 : vector<8x8x128xbf16> to vector<1x8x8x128xbf16>
    tpu.vector_store %arg5[%c0_46, %c0_47, %c0_48, %c0_49], %48 {strides = array<i32>} : memref<1x8x8x128xbf16, #tpu.memory_space<vmem>>, vector<1x8x8x128xbf16>,
    return
  }
  func.func @transform_0(%arg0: i32, %arg1: i32) -> (i32, i32, i32, i32) {
    %c0_i32 = arith.constant 0 : i32
    %c0_i32_0 = arith.constant 0 : i32
    %c0_i32_1 = arith.constant 0 : i32
    return %arg0, %arg1, %c0_i32, %c0_i32_0 : i32, i32, i32, i32
  }
  func.func @transform_1(%arg0: i32, %arg1: i32) -> (i32, i32) {
    %c0_i32 = arith.constant 0 : i32
    %c0_i32_0 = arith.constant 0 : i32
    %c0_i32_1 = arith.constant 0 : i32
    return %c0_i32, %c0_i32_0 : i32, i32
  }
  func.func @transform_2(%arg0: i32, %arg1: i32) -> (i32, i32) {
    %c0_i32 = arith.constant 0 : i32
    %c0_i32_0 = arith.constant 0 : i32
    %c0_i32_1 = arith.constant 0 : i32
    return %c0_i32, %c0_i32_0 : i32, i32
  }
  func.func @transform_3(%arg0: i32, %arg1: i32) -> (i32, i32, i32, i32) {
    %c0_i32 = arith.constant 0 : i32
    %c0_i32_0 = arith.constant 0 : i32
    %c0_i32_1 = arith.constant 0 : i32
    return %arg0, %arg1, %c0_i32, %c0_i32_0 : i32, i32, i32, i32
  }
}

</mosaic_0001>

<llo_original>
// kernel: downsample_forward.1
$region0: #{downsample_forward.1}
  #allocation0 [shape = 'u32[]', space=smem, size = 0x4, offset = 0x4, fixed_abs, tag = 'smem constant byte address 0x4 - core index']
  #allocation1 [shape = 'u32[72,128]{1,0:T(1,128)}', space=vmem, size = 0x9000, scoped, tag = 'internal scratch']
  #allocation2 [shape = 'bf16[64,1152]{1,0:T(8,128)(2,1)}', space=vmem, size = 0x24000, scoped, tag = 'scratch operand']
  %s0 = inlined_call_operand.vmem [shape: bf16[2,8,54,4], index: 0, kind: input, shape index: {}]
  %s1 = inlined_call_operand.vmem [shape: bf16[1152,128], index: 1, kind: input, shape index: {}]
  %s2 = inlined_call_operand.vmem [shape: f32[1,128], index: 2, kind: input, shape index: {}]
  %s3 = inlined_call_operand.vmem [shape: bf16[2,8,8,128], index: 3, kind: output, shape index: {}]
  %s4 = sld [smem:[#allocation0]]
  $region45: #{downsample_forward.1} parent=0
    _
  %s6 = ssub.s32 1, %s4
  %s7 = scalar_select 0, %s6, %s4
  loop: start=0, step=1, limit=4
  $region2: #{downsample_forward.1} parent=0 // loop_pre_header
    _
  $region3: #{downsample_forward.1} parent=0 // loop_header
    %s9 = sphi 0, %s13
    %p10 = scmp.ge.s32.totalorder %s9, 4
    %s16 = sphi 0, %s28
    %s17 = sphi 0, %s24
    %s18 = sphi 0, %s16
    %s19 = sphi 0, %s17
    %s20 = sphi 0, %s18
    %s21 = sphi 0, %s19
    %s33 = sphi 0, %s35
    %s36 = sphi 0, %s33
    %s37 = sphi 0, %s36
    %s53 = sphi 0, %s37
    %s57 = sphi 0, %s57
    %s59 = sphi 0, %s57
    %s60 = sphi 0, %s59
    %s74 = sphi 0, %s60
    %s78 = sphi 0, %s78
    %s80 = sphi 0, %s78
    %s81 = sphi 0, %s80
    %s95 = sphi 0, %s81
    %s103 = sphi 0, %s105
    %s106 = sphi 0, %s103
    %s107 = sphi 0, %s106
    %s123 = sphi 0, %s107
  $region4: #{downsample_forward.1} parent=0 // loop_header_branch
    %12 = sbr.rel (%p10) target = $region8
  $region5: #{downsample_forward.1} parent=0 // loop_body
    %s14 = ssub.s32 %s9, 1
    %s15 = ssub.s32 %s9, 2
    %s22 = sadd.s32 1, %s17
    %p23 = scmp.ge.s32.totalorder %s22, 1
    %s24 = scalar_select %p23, 0, %s22
    %s25 = sadd.s32 1, %s16
    %s26 = scalar_select %p23, %s25, %s16
    %p27 = scmp.ge.s32.totalorder %s26, 2
    %s28 = scalar_select %p27, 0, %s26
    %s29 = ssub.s32 %s16, %s28
    %s30 = ssub.s32 %s17, %s24
    %s31 = sor.u32 %s29, %s30
    %p32 = scmp.eq.s32.totalorder %s31, 0
    %s34 = sadd.s32 %s33, 1
    %s35 = scalar_select %p32, %s33, %s34
    %p38 = pneg %p32
    %p39 = scmp.eq.s32.totalorder %s9, 1
    %p40 = por %p38, %p39
    %p41 = scmp.ne.s32.totalorder %s33, %s36
    %p42 = scmp.eq.s32.totalorder %s9, 0
    %p43 = por %p41, %p42
    %p44 = scmp.ne.s32.totalorder %s33, %s36
    %p45 = scmp.eq.s32.totalorder %s14, 1
    %p46 = por %p44, %p45
    %p47 = scmp.ne.s32.totalorder %s36, %s37
    %p48 = scmp.eq.s32.totalorder %s14, 0
    %p49 = por %p47, %p48
    %p50 = scmp.ne.s32.totalorder %s36, %s37
    %p51 = scmp.eq.s32.totalorder %s15, 1
    %p52 = por %p50, %p51
    %p54 = scmp.ne.s32.totalorder %s37, %s53
    %p55 = scmp.eq.s32.totalorder %s15, 0
    %p56 = por %p54, %p55
    %s58 = sadd.s32 %s57, 1
    %p61 = scmp.eq.s32.totalorder %s9, 1
    %p62 = scmp.ne.s32.totalorder %s57, %s59
    %p63 = scmp.eq.s32.totalorder %s9, 0
    %p64 = por %p62, %p63
    %p65 = scmp.ne.s32.totalorder %s57, %s59
    %p66 = scmp.eq.s32.totalorder %s14, 1
    %p67 = por %p65, %p66
    %p68 = scmp.ne.s32.totalorder %s59, %s60
    %p69 = scmp.eq.s32.totalorder %s14, 0
    %p70 = por %p68, %p69
    %p71 = scmp.ne.s32.totalorder %s59, %s60
    %p72 = scmp.eq.s32.totalorder %s15, 1
    %p73 = por %p71, %p72
    %p75 = scmp.ne.s32.totalorder %s60, %s74
    %p76 = scmp.eq.s32.totalorder %s15, 0
    %p77 = por %p75, %p76
    %s79 = sadd.s32 %s78, 1
    %p82 = scmp.eq.s32.totalorder %s9, 1
    %p83 = scmp.ne.s32.totalorder %s78, %s80
    %p84 = scmp.eq.s32.totalorder %s9, 0
    %p85 = por %p83, %p84
    %p86 = scmp.ne.s32.totalorder %s78, %s80
    %p87 = scmp.eq.s32.totalorder %s14, 1
    %p88 = por %p86, %p87
    %p89 = scmp.ne.s32.totalorder %s80, %s81
    %p90 = scmp.eq.s32.totalorder %s14, 0
    %p91 = por %p89, %p90
    %p92 = scmp.ne.s32.totalorder %s80, %s81
    %p93 = scmp.eq.s32.totalorder %s15, 1
    %p94 = por %p92, %p93
    %p96 = scmp.ne.s32.totalorder %s81, %s95
    %p97 = scmp.eq.s32.totalorder %s15, 0
    %p98 = por %p96, %p97
    %s99 = ssub.s32 %s16, %s28
    %s100 = ssub.s32 %s17, %s24
    %s101 = sor.u32 %s99, %s100
    %p102 = scmp.eq.s32.totalorder %s101, 0
    %s104 = sadd.s32 %s103, 1
    %s105 = scalar_select %p102, %s103, %s104
    %p108 = pneg %p102
    %p109 = scmp.eq.s32.totalorder %s9, 1
    %p110 = por %p108, %p109
    %p111 = scmp.ne.s32.totalorder %s103, %s106
    %p112 = scmp.eq.s32.totalorder %s9, 0
    %p113 = por %p111, %p112
    %p114 = scmp.ne.s32.totalorder %s103, %s106
    %p115 = scmp.eq.s32.totalorder %s14, 1
    %p116 = por %p114, %p115
    %p117 = scmp.ne.s32.totalorder %s106, %s107
    %p118 = scmp.eq.s32.totalorder %s14, 0
    %p119 = por %p117, %p118
    %p120 = scmp.ne.s32.totalorder %s106, %s107
    %p121 = scmp.eq.s32.totalorder %s15, 1
    %p122 = por %p120, %p121
    %p124 = scmp.ne.s32.totalorder %s107, %s123
    %p125 = scmp.eq.s32.totalorder %s15, 0
    %p126 = por %p124, %p125
    %p127 = scmp.le.s32.totalorder 1, %s9
    %p128 = scmp.lt.s32.totalorder %s9, 3
    %p129 = pnand %p127, %p128
    %p130 = pneg %p129
    // Predicated region
    $region9: #{downsample_forward.1} parent=5 // pred_check
      _
    $region10: #{downsample_forward.1} parent=5 // pred_check_branch
      %132 = sbr.rel (%p129) target = $region12
    $region11: #{downsample_forward.1} parent=5 // pred_region
      %s133 = ssub.s32 %s9, 1
      // Predicated region
      $region13: #{downsample_forward.1} parent=11 // pred_check
        %p134 = pneg %p70
      $region14: #{downsample_forward.1} parent=11 // pred_check_branch
        %136 = sbr.rel (%p134) target = $region16
      $region15: #{downsample_forward.1} parent=11 // pred_region
        _
      $region16: #{downsample_forward.1} parent=11 // pred_fallthru
        _
      // Predicated region
      $region17: #{downsample_forward.1} parent=11 // pred_check
        %p137 = pneg %p91
      $region18: #{downsample_forward.1} parent=11 // pred_check_branch
        %139 = sbr.rel (%p137) target = $region20
      $region19: #{downsample_forward.1} parent=11 // pred_region
        _
      $region20: #{downsample_forward.1} parent=11 // pred_fallthru
        _
    $region12: #{downsample_forward.1} parent=5 // pred_fallthru
      _
    %p140 = scmp.lt.s32.totalorder %s9, 2
    // Predicated region
    $region21: #{downsample_forward.1} parent=5 // pred_check
      %p141 = pneg %p140
    $region22: #{downsample_forward.1} parent=5 // pred_check_branch
      %143 = sbr.rel (%p141) target = $region24
    $region23: #{downsample_forward.1} parent=5 // pred_region
      // Predicated region
      $region25: #{downsample_forward.1} parent=23 // pred_check
        %p144 = pneg %p43
      $region26: #{downsample_forward.1} parent=23 // pred_check_branch
        %146 = sbr.rel (%p144) target = $region28
      $region27: #{downsample_forward.1} parent=23 // pred_region
        %s147 = smul.u32 8, %s17
        %p148 = scmp.lt.s32.totalorder %s16, 1
        %s149 = scalar_select %p148, %s16, 1
        %p150 = scmp.lt.s32.totalorder %s147, 7
        %s151 = scalar_select %p150, %s147, 7
        %s152 = smul.addr %s151, 7
        %s153 = smul.addr %s149, 56
        %s154 = sadd.s32 %s152, %s153
        %s155 = smul.addr %s154, 4
        %s156 = scalar_lea.vmem %s0, %s155
        %s157 = smul.u32 8, %s17
      $region28: #{downsample_forward.1} parent=23 // pred_fallthru
        _
    $region24: #{downsample_forward.1} parent=5 // pred_fallthru
      _
    %p158 = scmp.le.s32.totalorder 1, %s9
    %p159 = scmp.lt.s32.totalorder %s9, 3
    %p160 = pnand %p158, %p159
    %p161 = pneg %p160
    // Predicated region
    $region29: #{downsample_forward.1} parent=5 // pred_check
      _
    $region30: #{downsample_forward.1} parent=5 // pred_check_branch
      %163 = sbr.rel (%p160) target = $region32
    $region31: #{downsample_forward.1} parent=5 // pred_region
      %s164 = ssub.s32 %s9, 1
      %s165 = smul.u32 8, %s19
      %p166 = scmp.lt.s32.totalorder %s18, 1
      %s167 = scalar_select %p166, %s18, 1
      %p168 = scmp.lt.s32.totalorder %s165, 7
      %s169 = scalar_select %p168, %s165, 7
      %s170 = smul.addr %s169, 7
      %s171 = smul.addr %s167, 56
      %s172 = sadd.s32 %s170, %s171
      %s173 = smul.addr %s172, 4
      %s174 = scalar_lea.vmem %s0, %s173
      %p175 = pneg %p49
      %p176 = pneg %p46
      %p177 = pneg %p70
      %p178 = pneg %p67
      %p179 = pneg %p91
      %p180 = pneg %p88
      %p181 = pneg %p119
      %p182 = pneg %p116
      %s183 = smul.u32 8, %s19
      %p184 = scmp.lt.s32.totalorder %s18, 1
      %s185 = scalar_select %p184, %s18, 1
      %p186 = scmp.lt.s32.totalorder %s183, 7
      %s187 = scalar_select %p186, %s183, 7
      %s188 = smul.addr %s185, 8
      %s189 = sadd.s32 %s187, %s188
      %s190 = smul.addr %s189, 4
      %s191 = scalar_lea.vmem %s3, %s190
      %s192 = smul.u32 8, %s19
      %p193 = scmp.lt.s32.totalorder %s18, 1
      %s194 = scalar_select %p193, %s18, 1
      %p195 = scmp.lt.s32.totalorder %s192, 7
      %s196 = scalar_select %p195, %s192, 7
      %s197 = smul.addr %s196, 7
      %s198 = smul.addr %s194, 56
      %s199 = sadd.s32 %s197, %s198
      %s200 = smul.addr %s199, 4
      %s201 = scalar_lea.vmem %s0, %s200
      %s202 = smul.u32 8, %s19
      %s203 = smul.u32 8, %s19
      %p204 = scmp.lt.s32.totalorder %s18, 1
      %s205 = scalar_select %p204, %s18, 1
      %p206 = scmp.lt.s32.totalorder %s203, 7
      %s207 = scalar_select %p206, %s203, 7
      %s208 = smul.addr %s205, 8
      %s209 = sadd.s32 %s207, %s208
      %s210 = smul.addr %s209, 4
      %s211 = scalar_lea.vmem %s3, %s210
      %s212 = smul.u32 8, %s19
      %214 = vst [vmem:[#allocation2] sm:$0xff] 0
      %215 = vst [vmem:[#allocation2 + $0x8] sm:$0xff] 0
      %216 = vst [vmem:[#allocation2 + $0x10] sm:$0xff] 0
      %217 = vst [vmem:[#allocation2 + $0x18] sm:$0xff] 0
      %218 = vst [vmem:[#allocation2 + $0x20] sm:$0xf] 0
      %219 = vst [vmem:[#allocation2 + $0x24] sm:$0xff] 0
      %220 = vst [vmem:[#allocation2 + $0x2c] sm:$0xff] 0
      %221 = vst [vmem:[#allocation2 + $0x34] sm:$0xff] 0
      %222 = vst [vmem:[#allocation2 + $0x3c] sm:$0xff] 0
      %223 = vst [vmem:[#allocation2 + $0x44] sm:$0xf] 0
      %224 = vst [vmem:[#allocation2 + $0x48] sm:$0xff] 0
      %225 = vst [vmem:[#allocation2 + $0x50] sm:$0xff] 0
      %226 = vst [vmem:[#allocation2 + $0x58] sm:$0xff] 0
      %227 = vst [vmem:[#allocation2 + $0x60] sm:$0xff] 0
      %228 = vst [vmem:[#allocation2 + $0x68] sm:$0xf] 0
      %229 = vst [vmem:[#allocation2 + $0x6c] sm:$0xff] 0
      %230 = vst [vmem:[#allocation2 + $0x74] sm:$0xff] 0
      %231 = vst [vmem:[#allocation2 + $0x7c] sm:$0xff] 0
      %232 = vst [vmem:[#allocation2 + $0x84] sm:$0xff] 0
      %233 = vst [vmem:[#allocation2 + $0x8c] sm:$0xf] 0
      %234 = vst [vmem:[#allocation2 + $0x90] sm:$0xff] 0
      %235 = vst [vmem:[#allocation2 + $0x98] sm:$0xff] 0
      %236 = vst [vmem:[#allocation2 + $0xa0] sm:$0xff] 0
      %237 = vst [vmem:[#allocation2 + $0xa8] sm:$0xff] 0
      %238 = vst [vmem:[#allocation2 + $0xb0] sm:$0xf] 0
      %239 = vst [vmem:[#allocation2 + $0xb4] sm:$0xff] 0
      %240 = vst [vmem:[#allocation2 + $0xbc] sm:$0xff] 0
      %241 = vst [vmem:[#allocation2 + $0xc4] sm:$0xff] 0
      %242 = vst [vmem:[#allocation2 + $0xcc] sm:$0xff] 0
      %243 = vst [vmem:[#allocation2 + $0xd4] sm:$0xf] 0
      %244 = vst [vmem:[#allocation2 + $0xd8] sm:$0xff] 0
      %245 = vst [vmem:[#allocation2 + $0xe0] sm:$0xff] 0
      %246 = vst [vmem:[#allocation2 + $0xe8] sm:$0xff] 0
      %247 = vst [vmem:[#allocation2 + $0xf0] sm:$0xff] 0
      %248 = vst [vmem:[#allocation2 + $0xf8] sm:$0xf] 0
      %249 = vst [vmem:[#allocation2 + $0xfc] sm:$0xff] 0
      %250 = vst [vmem:[#allocation2 + $0x104] sm:$0xff] 0
      %251 = vst [vmem:[#allocation2 + $0x10c] sm:$0xff] 0
      %252 = vst [vmem:[#allocation2 + $0x114] sm:$0xff] 0
      %253 = vst [vmem:[#allocation2 + $0x11c] sm:$0xf] 0
      %v254 = vld [vmem:[%s201] sm:$0xf]
      %v255 = vld [vmem:[%s201 + $0x1c] sm:$0xf]
      %v256 = vld [vmem:[%s201 + $0x38] sm:$0xf]
      %v257 = vld [vmem:[%s201 + $0x54] sm:$0xf]
      %v258 = vld [vmem:[%s201 + $0x70] sm:$0xf]
      %v259 = vld [vmem:[%s201 + $0x8c] sm:$0xf]
      %v260 = vld [vmem:[%s201 + $0xa8] sm:$0xf]
      %v261 = vld [vmem:[%s201 + $0xc4] sm:$0xf]
      %vm262 = vcmask 27648
      %263 = vst.msk [vmem:[#allocation2] sm:$0xf] %vm262, %v254
      %264 = vst.msk [vmem:[#allocation2 + $0x24] sm:$0xf] %vm262, %v255
      %265 = vst.msk [vmem:[#allocation2 + $0x48] sm:$0xf] %vm262, %v256
      %266 = vst.msk [vmem:[#allocation2 + $0x6c] sm:$0xf] %vm262, %v257
      %267 = vst.msk [vmem:[#allocation2 + $0x90] sm:$0xf] %vm262, %v258
      %268 = vst.msk [vmem:[#allocation2 + $0xb4] sm:$0xf] %vm262, %v259
      %269 = vst.msk [vmem:[#allocation2 + $0xd8] sm:$0xf] %vm262, %v260
      %270 = vst.msk [vmem:[#allocation2 + $0xfc] sm:$0xf] %vm262, %v261
      %v271 = vld [vmem:[%s201 + $0x4] sm:$0xf]
      %v272 = vld [vmem:[%s201 + $0x8] sm:$0x1]
      %v273 = vld [vmem:[%s201 + $0x20] sm:$0xf]
      %v274 = vld [vmem:[%s201 + $0x24] sm:$0x1]
      %v275 = vld [vmem:[%s201 + $0x3c] sm:$0xf]
      %v276 = vld [vmem:[%s201 + $0x40] sm:$0x1]
      %v277 = vld [vmem:[%s201 + $0x58] sm:$0xf]
      %v278 = vld [vmem:[%s201 + $0x5c] sm:$0x1]
      %v279 = vld [vmem:[%s201 + $0x74] sm:$0xf]
      %v280 = vld [vmem:[%s201 + $0x78] sm:$0x1]
      %v281 = vld [vmem:[%s201 + $0x90] sm:$0xf]
      %v282 = vld [vmem:[%s201 + $0x94] sm:$0x1]
      %v283 = vld [vmem:[%s201 + $0xac] sm:$0xf]
      %v284 = vld [vmem:[%s201 + $0xb0] sm:$0x1]
      %v285 = vld [vmem:[%s201 + $0xc8] sm:$0xf]
      %v286 = vld [vmem:[%s201 + $0xcc] sm:$0x1]
      %vm287 = vsmask.f32 3328
      %vm288 = vsmask.f32 7440
      %vm289 = vmor %vm287, %vm288
      %v291 = vshrl.u32 %v271, 16
      %v293 = vrot.slane %v291, 4
      %v294 = vshll.u32 %v271, 16
      %v296 = vrot.slane %v294, 5
      %v297 = vor.u32 %v293, %v296
      %v298 = vrot.slane %v297, 4
      %v300 = vshll.u32 %v272, 16
      %v302 = vrot.slane %v300, 5
      %v303 = vsel %vm289, %v298, %v302
      %v305 = vshrl.u32 %v273, 16
      %v307 = vrot.slane %v305, 4
      %v308 = vshll.u32 %v273, 16
      %v310 = vrot.slane %v308, 5
      %v311 = vor.u32 %v307, %v310
      %v312 = vrot.slane %v311, 4
      %v314 = vshll.u32 %v274, 16
      %v316 = vrot.slane %v314, 5
      %v317 = vsel %vm289, %v312, %v316
      %v319 = vshrl.u32 %v275, 16
      %v321 = vrot.slane %v319, 4
      %v322 = vshll.u32 %v275, 16
      %v324 = vrot.slane %v322, 5
      %v325 = vor.u32 %v321, %v324
      %v326 = vrot.slane %v325, 4
      %v328 = vshll.u32 %v276, 16
      %v330 = vrot.slane %v328, 5
      %v331 = vsel %vm289, %v326, %v330
      %v333 = vshrl.u32 %v277, 16
      %v335 = vrot.slane %v333, 4
      %v336 = vshll.u32 %v277, 16
      %v338 = vrot.slane %v336, 5
      %v339 = vor.u32 %v335, %v338
      %v340 = vrot.slane %v339, 4
      %v342 = vshll.u32 %v278, 16
      %v344 = vrot.slane %v342, 5
      %v345 = vsel %vm289, %v340, %v344
      %v347 = vshrl.u32 %v279, 16
      %v349 = vrot.slane %v347, 4
      %v350 = vshll.u32 %v279, 16
      %v352 = vrot.slane %v350, 5
      %v353 = vor.u32 %v349, %v352
      %v354 = vrot.slane %v353, 4
      %v356 = vshll.u32 %v280, 16
      %v358 = vrot.slane %v356, 5
      %v359 = vsel %vm289, %v354, %v358
      %v361 = vshrl.u32 %v281, 16
      %v363 = vrot.slane %v361, 4
      %v364 = vshll.u32 %v281, 16
      %v366 = vrot.slane %v364, 5
      %v367 = vor.u32 %v363, %v366
      %v368 = vrot.slane %v367, 4
      %v370 = vshll.u32 %v282, 16
      %v372 = vrot.slane %v370, 5
      %v373 = vsel %vm289, %v368, %v372
      %v375 = vshrl.u32 %v283, 16
      %v377 = vrot.slane %v375, 4
      %v378 = vshll.u32 %v283, 16
      %v380 = vrot.slane %v378, 5
      %v381 = vor.u32 %v377, %v380
      %v382 = vrot.slane %v381, 4
      %v384 = vshll.u32 %v284, 16
      %v386 = vrot.slane %v384, 5
      %v387 = vsel %vm289, %v382, %v386
      %v389 = vshrl.u32 %v285, 16
      %v391 = vrot.slane %v389, 4
      %v392 = vshll.u32 %v285, 16
      %v394 = vrot.slane %v392, 5
      %v395 = vor.u32 %v391, %v394
      %v396 = vrot.slane %v395, 4
      %v398 = vshll.u32 %v286, 16
      %v400 = vrot.slane %v398, 5
      %v401 = vsel %vm289, %v396, %v400
      %410 = vst.msk [vmem:[#allocation2 + $0x4] sm:$0xf] %vm262, %v303
      %411 = vst.msk [vmem:[#allocation2 + $0x28] sm:$0xf] %vm262, %v317
      %412 = vst.msk [vmem:[#allocation2 + $0x4c] sm:$0xf] %vm262, %v331
      %413 = vst.msk [vmem:[#allocation2 + $0x70] sm:$0xf] %vm262, %v345
      %414 = vst.msk [vmem:[#allocation2 + $0x94] sm:$0xf] %vm262, %v359
      %415 = vst.msk [vmem:[#allocation2 + $0xb8] sm:$0xf] %vm262, %v373
      %416 = vst.msk [vmem:[#allocation2 + $0xdc] sm:$0xf] %vm262, %v387
      %417 = vst.msk [vmem:[#allocation2 + $0x100] sm:$0xf] %vm262, %v401
      %v418 = vld [vmem:[%s201] sm:$0xf]
      %v419 = vld [vmem:[%s201 + $0x4] sm:$0x1]
      %v420 = vld [vmem:[%s201 + $0x1c] sm:$0xf]
      %v421 = vld [vmem:[%s201 + $0x20] sm:$0x1]
      %v422 = vld [vmem:[%s201 + $0x38] sm:$0xf]
      %v423 = vld [vmem:[%s201 + $0x3c] sm:$0x1]
      %v424 = vld [vmem:[%s201 + $0x54] sm:$0xf]
      %v425 = vld [vmem:[%s201 + $0x58] sm:$0x1]
      %v426 = vld [vmem:[%s201 + $0x70] sm:$0xf]
      %v427 = vld [vmem:[%s201 + $0x74] sm:$0x1]
      %v428 = vld [vmem:[%s201 + $0x8c] sm:$0xf]
      %v429 = vld [vmem:[%s201 + $0x90] sm:$0x1]
      %v430 = vld [vmem:[%s201 + $0xa8] sm:$0xf]
      %v431 = vld [vmem:[%s201 + $0xac] sm:$0x1]
      %v432 = vld [vmem:[%s201 + $0xc4] sm:$0xf]
      %v433 = vld [vmem:[%s201 + $0xc8] sm:$0x1]
      %v435 = vshrl.u32 %v418, 16
      %v437 = vrot.slane %v435, 4
      %v438 = vshll.u32 %v418, 16
      %v440 = vrot.slane %v438, 5
      %v441 = vor.u32 %v437, %v440
      %v442 = vrot.slane %v441, 4
      %v444 = vshll.u32 %v419, 16
      %v446 = vrot.slane %v444, 5
      %v447 = vsel %vm289, %v442, %v446
      %v449 = vshrl.u32 %v420, 16
      %v451 = vrot.slane %v449, 4
      %v452 = vshll.u32 %v420, 16
      %v454 = vrot.slane %v452, 5
      %v455 = vor.u32 %v451, %v454
      %v456 = vrot.slane %v455, 4
      %v458 = vshll.u32 %v421, 16
      %v460 = vrot.slane %v458, 5
      %v461 = vsel %vm289, %v456, %v460
      %v463 = vshrl.u32 %v422, 16
      %v465 = vrot.slane %v463, 4
      %v466 = vshll.u32 %v422, 16
      %v468 = vrot.slane %v466, 5
      %v469 = vor.u32 %v465, %v468
      %v470 = vrot.slane %v469, 4
      %v472 = vshll.u32 %v423, 16
      %v474 = vrot.slane %v472, 5
      %v475 = vsel %vm289, %v470, %v474
      %v477 = vshrl.u32 %v424, 16
      %v479 = vrot.slane %v477, 4
      %v480 = vshll.u32 %v424, 16
      %v482 = vrot.slane %v480, 5
      %v483 = vor.u32 %v479, %v482
      %v484 = vrot.slane %v483, 4
      %v486 = vshll.u32 %v425, 16
      %v488 = vrot.slane %v486, 5
      %v489 = vsel %vm289, %v484, %v488
      %v491 = vshrl.u32 %v426, 16
      %v493 = vrot.slane %v491, 4
      %v494 = vshll.u32 %v426, 16
      %v496 = vrot.slane %v494, 5
      %v497 = vor.u32 %v493, %v496
      %v498 = vrot.slane %v497, 4
      %v500 = vshll.u32 %v427, 16
      %v502 = vrot.slane %v500, 5
      %v503 = vsel %vm289, %v498, %v502
      %v505 = vshrl.u32 %v428, 16
      %v507 = vrot.slane %v505, 4
      %v508 = vshll.u32 %v428, 16
      %v510 = vrot.slane %v508, 5
      %v511 = vor.u32 %v507, %v510
      %v512 = vrot.slane %v511, 4
      %v514 = vshll.u32 %v429, 16
      %v516 = vrot.slane %v514, 5
      %v517 = vsel %vm289, %v512, %v516
      %v519 = vshrl.u32 %v430, 16
      %v521 = vrot.slane %v519, 4
      %v522 = vshll.u32 %v430, 16
      %v524 = vrot.slane %v522, 5
      %v525 = vor.u32 %v521, %v524
      %v526 = vrot.slane %v525, 4
      %v528 = vshll.u32 %v431, 16
      %v530 = vrot.slane %v528, 5
      %v531 = vsel %vm289, %v526, %v530
      %v533 = vshrl.u32 %v432, 16
      %v535 = vrot.slane %v533, 4
      %v536 = vshll.u32 %v432, 16
      %v538 = vrot.slane %v536, 5
      %v539 = vor.u32 %v535, %v538
      %v540 = vrot.slane %v539, 4
      %v542 = vshll.u32 %v433, 16
      %v544 = vrot.slane %v542, 5
      %v545 = vsel %vm289, %v540, %v544
      %554 = vst.msk [vmem:[#allocation2 + $0x8] sm:$0xf] %vm262, %v447
      %555 = vst.msk [vmem:[#allocation2 + $0x2c] sm:$0xf] %vm262, %v461
      %556 = vst.msk [vmem:[#allocation2 + $0x50] sm:$0xf] %vm262, %v475
      %557 = vst.msk [vmem:[#allocation2 + $0x74] sm:$0xf] %vm262, %v489
      %558 = vst.msk [vmem:[#allocation2 + $0x98] sm:$0xf] %vm262, %v503
      %559 = vst.msk [vmem:[#allocation2 + $0xbc] sm:$0xf] %vm262, %v517
      %560 = vst.msk [vmem:[#allocation2 + $0xe0] sm:$0xf] %vm262, %v531
      %561 = vst.msk [vmem:[#allocation2 + $0x104] sm:$0xf] %vm262, %v545
      %v562 = vld [vmem:[%s201 + $0x8] sm:$0xe]
      %v563 = vld [vmem:[%s201 + $0xc] sm:$0x1]
      %v564 = vld [vmem:[%s201 + $0x24] sm:$0xe]
      %v565 = vld [vmem:[%s201 + $0x28] sm:$0x1]
      %v566 = vld [vmem:[%s201 + $0x40] sm:$0xe]
      %v567 = vld [vmem:[%s201 + $0x44] sm:$0x1]
      %v568 = vld [vmem:[%s201 + $0x5c] sm:$0xe]
      %v569 = vld [vmem:[%s201 + $0x60] sm:$0x1]
      %v570 = vld [vmem:[%s201 + $0x78] sm:$0xe]
      %v571 = vld [vmem:[%s201 + $0x7c] sm:$0x1]
      %v572 = vld [vmem:[%s201 + $0x94] sm:$0xe]
      %v573 = vld [vmem:[%s201 + $0x98] sm:$0x1]
      %v574 = vld [vmem:[%s201 + $0xb0] sm:$0xe]
      %v575 = vld [vmem:[%s201 + $0xb4] sm:$0x1]
      %v576 = vld [vmem:[%s201 + $0xcc] sm:$0xe]
      %v577 = vld [vmem:[%s201 + $0xd0] sm:$0x1]
      %vm594 = vcmask 1042432
      %vm595 = vcmask 1046532
      %vm596 = vmor %vm594, %vm595
      %v597 = vrot.slane %v562, 5
      %v598 = vrot.slane %v597, 4
      %v599 = vrot.slane %v563, 5
      %v600 = vsel %vm596, %v598, %v599
      %v601 = vrot.slane %v564, 5
      %v602 = vrot.slane %v601, 4
      %v603 = vrot.slane %v565, 5
      %v604 = vsel %vm596, %v602, %v603
      %v605 = vrot.slane %v566, 5
      %v606 = vrot.slane %v605, 4
      %v607 = vrot.slane %v567, 5
      %v608 = vsel %vm596, %v606, %v607
      %v609 = vrot.slane %v568, 5
      %v610 = vrot.slane %v609, 4
      %v611 = vrot.slane %v569, 5
      %v612 = vsel %vm596, %v610, %v611
      %v613 = vrot.slane %v570, 5
      %v614 = vrot.slane %v613, 4
      %v615 = vrot.slane %v571, 5
      %v616 = vsel %vm596, %v614, %v615
      %v617 = vrot.slane %v572, 5
      %v618 = vrot.slane %v617, 4
      %v619 = vrot.slane %v573, 5
      %v620 = vsel %vm596, %v618, %v619
      %v621 = vrot.slane %v574, 5
      %v622 = vrot.slane %v621, 4
      %v623 = vrot.slane %v575, 5
      %v624 = vsel %vm596, %v622, %v623
      %v625 = vrot.slane %v576, 5
      %v626 = vrot.slane %v625, 4
      %v627 = vrot.slane %v577, 5
      %v628 = vsel %vm596, %v626, %v627
      %637 = vst.msk [vmem:[#allocation2 + $0xc] sm:$0xf] %vm262, %v600
      %638 = vst.msk [vmem:[#allocation2 + $0x30] sm:$0xf] %vm262, %v604
      %639 = vst.msk [vmem:[#allocation2 + $0x54] sm:$0xf] %vm262, %v608
      %640 = vst.msk [vmem:[#allocation2 + $0x78] sm:$0xf] %vm262, %v612
      %641 = vst.msk [vmem:[#allocation2 + $0x9c] sm:$0xf] %vm262, %v616
      %642 = vst.msk [vmem:[#allocation2 + $0xc0] sm:$0xf] %vm262, %v620
      %643 = vst.msk [vmem:[#allocation2 + $0xe4] sm:$0xf] %vm262, %v624
      %644 = vst.msk [vmem:[#allocation2 + $0x108] sm:$0xf] %vm262, %v628
      %v645 = vld [vmem:[%s201 + $0xc] sm:$0xe]
      %v646 = vld [vmem:[%s201 + $0x10] sm:$0x3]
      %v647 = vld [vmem:[%s201 + $0x28] sm:$0xe]
      %v648 = vld [vmem:[%s201 + $0x2c] sm:$0x3]
      %v649 = vld [vmem:[%s201 + $0x44] sm:$0xe]
      %v650 = vld [vmem:[%s201 + $0x48] sm:$0x3]
      %v651 = vld [vmem:[%s201 + $0x60] sm:$0xe]
      %v652 = vld [vmem:[%s201 + $0x64] sm:$0x3]
      %v653 = vld [vmem:[%s201 + $0x7c] sm:$0xe]
      %v654 = vld [vmem:[%s201 + $0x80] sm:$0x3]
      %v655 = vld [vmem:[%s201 + $0x98] sm:$0xe]
      %v656 = vld [vmem:[%s201 + $0x9c] sm:$0x3]
      %v657 = vld [vmem:[%s201 + $0xb4] sm:$0xe]
      %v658 = vld [vmem:[%s201 + $0xb8] sm:$0x3]
      %v659 = vld [vmem:[%s201 + $0xd0] sm:$0xe]
      %v660 = vld [vmem:[%s201 + $0xd4] sm:$0x3]
      %vm661 = vsmask.f32 2304
      %vm662 = vsmask.f32 6416
      %vm663 = vmor %vm661, %vm662
      %v665 = vshrl.u32 %v645, 16
      %v667 = vrot.slane %v665, 5
      %v668 = vshll.u32 %v645, 16
      %v670 = vrot.slane %v668, 6
      %v671 = vor.u32 %v667, %v670
      %v672 = vrot.slane %v671, 4
      %v674 = vshrl.u32 %v646, 16
      %v676 = vrot.slane %v674, 5
      %v677 = vshll.u32 %v646, 16
      %v679 = vrot.slane %v677, 6
      %v680 = vor.u32 %v676, %v679
      %v681 = vsel %vm663, %v672, %v680
      %v683 = vshrl.u32 %v647, 16
      %v685 = vrot.slane %v683, 5
      %v686 = vshll.u32 %v647, 16
      %v688 = vrot.slane %v686, 6
      %v689 = vor.u32 %v685, %v688
      %v690 = vrot.slane %v689, 4
      %v692 = vshrl.u32 %v648, 16
      %v694 = vrot.slane %v692, 5
      %v695 = vshll.u32 %v648, 16
      %v697 = vrot.slane %v695, 6
      %v698 = vor.u32 %v694, %v697
      %v699 = vsel %vm663, %v690, %v698
      %v701 = vshrl.u32 %v649, 16
      %v703 = vrot.slane %v701, 5
      %v704 = vshll.u32 %v649, 16
      %v706 = vrot.slane %v704, 6
      %v707 = vor.u32 %v703, %v706
      %v708 = vrot.slane %v707, 4
      %v710 = vshrl.u32 %v650, 16
      %v712 = vrot.slane %v710, 5
      %v713 = vshll.u32 %v650, 16
      %v715 = vrot.slane %v713, 6
      %v716 = vor.u32 %v712, %v715
      %v717 = vsel %vm663, %v708, %v716
      %v719 = vshrl.u32 %v651, 16
      %v721 = vrot.slane %v719, 5
      %v722 = vshll.u32 %v651, 16
      %v724 = vrot.slane %v722, 6
      %v725 = vor.u32 %v721, %v724
      %v726 = vrot.slane %v725, 4
      %v728 = vshrl.u32 %v652, 16
      %v730 = vrot.slane %v728, 5
      %v731 = vshll.u32 %v652, 16
      %v733 = vrot.slane %v731, 6
      %v734 = vor.u32 %v730, %v733
      %v735 = vsel %vm663, %v726, %v734
      %v737 = vshrl.u32 %v653, 16
      %v739 = vrot.slane %v737, 5
      %v740 = vshll.u32 %v653, 16
      %v742 = vrot.slane %v740, 6
      %v743 = vor.u32 %v739, %v742
      %v744 = vrot.slane %v743, 4
      %v746 = vshrl.u32 %v654, 16
      %v748 = vrot.slane %v746, 5
      %v749 = vshll.u32 %v654, 16
      %v751 = vrot.slane %v749, 6
      %v752 = vor.u32 %v748, %v751
      %v753 = vsel %vm663, %v744, %v752
      %v755 = vshrl.u32 %v655, 16
      %v757 = vrot.slane %v755, 5
      %v758 = vshll.u32 %v655, 16
      %v760 = vrot.slane %v758, 6
      %v761 = vor.u32 %v757, %v760
      %v762 = vrot.slane %v761, 4
      %v764 = vshrl.u32 %v656, 16
      %v766 = vrot.slane %v764, 5
      %v767 = vshll.u32 %v656, 16
      %v769 = vrot.slane %v767, 6
      %v770 = vor.u32 %v766, %v769
      %v771 = vsel %vm663, %v762, %v770
      %v773 = vshrl.u32 %v657, 16
      %v775 = vrot.slane %v773, 5
      %v776 = vshll.u32 %v657, 16
      %v778 = vrot.slane %v776, 6
      %v779 = vor.u32 %v775, %v778
      %v780 = vrot.slane %v779, 4
      %v782 = vshrl.u32 %v658, 16
      %v784 = vrot.slane %v782, 5
      %v785 = vshll.u32 %v658, 16
      %v787 = vrot.slane %v785, 6
      %v788 = vor.u32 %v784, %v787
      %v789 = vsel %vm663, %v780, %v788
      %v791 = vshrl.u32 %v659, 16
      %v793 = vrot.slane %v791, 5
      %v794 = vshll.u32 %v659, 16
      %v796 = vrot.slane %v794, 6
      %v797 = vor.u32 %v793, %v796
      %v798 = vrot.slane %v797, 4
      %v800 = vshrl.u32 %v660, 16
      %v802 = vrot.slane %v800, 5
      %v803 = vshll.u32 %v660, 16
      %v805 = vrot.slane %v803, 6
      %v806 = vor.u32 %v802, %v805
      %v807 = vsel %vm663, %v798, %v806
      %816 = vst.msk [vmem:[#allocation2 + $0x10] sm:$0xf] %vm262, %v681
      %817 = vst.msk [vmem:[#allocation2 + $0x34] sm:$0xf] %vm262, %v699
      %818 = vst.msk [vmem:[#allocation2 + $0x58] sm:$0xf] %vm262, %v717
      %819 = vst.msk [vmem:[#allocation2 + $0x7c] sm:$0xf] %vm262, %v735
      %820 = vst.msk [vmem:[#allocation2 + $0xa0] sm:$0xf] %vm262, %v753
      %821 = vst.msk [vmem:[#allocation2 + $0xc4] sm:$0xf] %vm262, %v771
      %822 = vst.msk [vmem:[#allocation2 + $0xe8] sm:$0xf] %vm262, %v789
      %823 = vst.msk [vmem:[#allocation2 + $0x10c] sm:$0xf] %vm262, %v807
      %v824 = vld [vmem:[%s201 + $0x8] sm:$0xe]
      %v825 = vld [vmem:[%s201 + $0xc] sm:$0x3]
      %v826 = vld [vmem:[%s201 + $0x24] sm:$0xe]
      %v827 = vld [vmem:[%s201 + $0x28] sm:$0x3]
      %v828 = vld [vmem:[%s201 + $0x40] sm:$0xe]
      %v829 = vld [vmem:[%s201 + $0x44] sm:$0x3]
      %v830 = vld [vmem:[%s201 + $0x5c] sm:$0xe]
      %v831 = vld [vmem:[%s201 + $0x60] sm:$0x3]
      %v832 = vld [vmem:[%s201 + $0x78] sm:$0xe]
      %v833 = vld [vmem:[%s201 + $0x7c] sm:$0x3]
      %v834 = vld [vmem:[%s201 + $0x94] sm:$0xe]
      %v835 = vld [vmem:[%s201 + $0x98] sm:$0x3]
      %v836 = vld [vmem:[%s201 + $0xb0] sm:$0xe]
      %v837 = vld [vmem:[%s201 + $0xb4] sm:$0x3]
      %v838 = vld [vmem:[%s201 + $0xcc] sm:$0xe]
      %v839 = vld [vmem:[%s201 + $0xd0] sm:$0x3]
      %v841 = vshrl.u32 %v824, 16
      %v843 = vrot.slane %v841, 5
      %v844 = vshll.u32 %v824, 16
      %v846 = vrot.slane %v844, 6
      %v847 = vor.u32 %v843, %v846
      %v848 = vrot.slane %v847, 4
      %v850 = vshrl.u32 %v825, 16
      %v852 = vrot.slane %v850, 5
      %v853 = vshll.u32 %v825, 16
      %v855 = vrot.slane %v853, 6
      %v856 = vor.u32 %v852, %v855
      %v857 = vsel %vm663, %v848, %v856
      %v859 = vshrl.u32 %v826, 16
      %v861 = vrot.slane %v859, 5
      %v862 = vshll.u32 %v826, 16
      %v864 = vrot.slane %v862, 6
      %v865 = vor.u32 %v861, %v864
      %v866 = vrot.slane %v865, 4
      %v868 = vshrl.u32 %v827, 16
      %v870 = vrot.slane %v868, 5
      %v871 = vshll.u32 %v827, 16
      %v873 = vrot.slane %v871, 6
      %v874 = vor.u32 %v870, %v873
      %v875 = vsel %vm663, %v866, %v874
      %v877 = vshrl.u32 %v828, 16
      %v879 = vrot.slane %v877, 5
      %v880 = vshll.u32 %v828, 16
      %v882 = vrot.slane %v880, 6
      %v883 = vor.u32 %v879, %v882
      %v884 = vrot.slane %v883, 4
      %v886 = vshrl.u32 %v829, 16
      %v888 = vrot.slane %v886, 5
      %v889 = vshll.u32 %v829, 16
      %v891 = vrot.slane %v889, 6
      %v892 = vor.u32 %v888, %v891
      %v893 = vsel %vm663, %v884, %v892
      %v895 = vshrl.u32 %v830, 16
      %v897 = vrot.slane %v895, 5
      %v898 = vshll.u32 %v830, 16
      %v900 = vrot.slane %v898, 6
      %v901 = vor.u32 %v897, %v900
      %v902 = vrot.slane %v901, 4
      %v904 = vshrl.u32 %v831, 16
      %v906 = vrot.slane %v904, 5
      %v907 = vshll.u32 %v831, 16
      %v909 = vrot.slane %v907, 6
      %v910 = vor.u32 %v906, %v909
      %v911 = vsel %vm663, %v902, %v910
      %v913 = vshrl.u32 %v832, 16
      %v915 = vrot.slane %v913, 5
      %v916 = vshll.u32 %v832, 16
      %v918 = vrot.slane %v916, 6
      %v919 = vor.u32 %v915, %v918
      %v920 = vrot.slane %v919, 4
      %v922 = vshrl.u32 %v833, 16
      %v924 = vrot.slane %v922, 5
      %v925 = vshll.u32 %v833, 16
      %v927 = vrot.slane %v925, 6
      %v928 = vor.u32 %v924, %v927
      %v929 = vsel %vm663, %v920, %v928
      %v931 = vshrl.u32 %v834, 16
      %v933 = vrot.slane %v931, 5
      %v934 = vshll.u32 %v834, 16
      %v936 = vrot.slane %v934, 6
      %v937 = vor.u32 %v933, %v936
      %v938 = vrot.slane %v937, 4
      %v940 = vshrl.u32 %v835, 16
      %v942 = vrot.slane %v940, 5
      %v943 = vshll.u32 %v835, 16
      %v945 = vrot.slane %v943, 6
      %v946 = vor.u32 %v942, %v945
      %v947 = vsel %vm663, %v938, %v946
      %v949 = vshrl.u32 %v836, 16
      %v951 = vrot.slane %v949, 5
      %v952 = vshll.u32 %v836, 16
      %v954 = vrot.slane %v952, 6
      %v955 = vor.u32 %v951, %v954
      %v956 = vrot.slane %v955, 4
      %v958 = vshrl.u32 %v837, 16
      %v960 = vrot.slane %v958, 5
      %v961 = vshll.u32 %v837, 16
      %v963 = vrot.slane %v961, 6
      %v964 = vor.u32 %v960, %v963
      %v965 = vsel %vm663, %v956, %v964
      %v967 = vshrl.u32 %v838, 16
      %v969 = vrot.slane %v967, 5
      %v970 = vshll.u32 %v838, 16
      %v972 = vrot.slane %v970, 6
      %v973 = vor.u32 %v969, %v972
      %v974 = vrot.slane %v973, 4
      %v976 = vshrl.u32 %v839, 16
      %v978 = vrot.slane %v976, 5
      %v979 = vshll.u32 %v839, 16
      %v981 = vrot.slane %v979, 6
      %v982 = vor.u32 %v978, %v981
      %v983 = vsel %vm663, %v974, %v982
      %992 = vst.msk [vmem:[#allocation2 + $0x14] sm:$0xf] %vm262, %v857
      %993 = vst.msk [vmem:[#allocation2 + $0x38] sm:$0xf] %vm262, %v875
      %994 = vst.msk [vmem:[#allocation2 + $0x5c] sm:$0xf] %vm262, %v893
      %995 = vst.msk [vmem:[#allocation2 + $0x80] sm:$0xf] %vm262, %v911
      %996 = vst.msk [vmem:[#allocation2 + $0xa4] sm:$0xf] %vm262, %v929
      %997 = vst.msk [vmem:[#allocation2 + $0xc8] sm:$0xf] %vm262, %v947
      %998 = vst.msk [vmem:[#allocation2 + $0xec] sm:$0xf] %vm262, %v965
      %999 = vst.msk [vmem:[#allocation2 + $0x110] sm:$0xf] %vm262, %v983
      %v1000 = vld [vmem:[%s201 + $0x10] sm:$0xc]
      %v1001 = vld [vmem:[%s201 + $0x14] sm:$0x3]
      %v1002 = vld [vmem:[%s201 + $0x2c] sm:$0xc]
      %v1003 = vld [vmem:[%s201 + $0x30] sm:$0x3]
      %v1004 = vld [vmem:[%s201 + $0x48] sm:$0xc]
      %v1005 = vld [vmem:[%s201 + $0x4c] sm:$0x3]
      %v1006 = vld [vmem:[%s201 + $0x64] sm:$0xc]
      %v1007 = vld [vmem:[%s201 + $0x68] sm:$0x3]
      %v1008 = vld [vmem:[%s201 + $0x80] sm:$0xc]
      %v1009 = vld [vmem:[%s201 + $0x84] sm:$0x3]
      %v1010 = vld [vmem:[%s201 + $0x9c] sm:$0xc]
      %v1011 = vld [vmem:[%s201 + $0xa0] sm:$0x3]
      %v1012 = vld [vmem:[%s201 + $0xb8] sm:$0xc]
      %v1013 = vld [vmem:[%s201 + $0xbc] sm:$0x3]
      %v1014 = vld [vmem:[%s201 + $0xd4] sm:$0xc]
      %v1015 = vld [vmem:[%s201 + $0xd8] sm:$0x3]
      %vm1032 = vcmask 1041408
      %vm1033 = vcmask 1045508
      %vm1034 = vmor %vm1032, %vm1033
      %v1035 = vrot.slane %v1000, 6
      %v1036 = vrot.slane %v1035, 4
      %v1037 = vrot.slane %v1001, 6
      %v1038 = vsel %vm1034, %v1036, %v1037
      %v1039 = vrot.slane %v1002, 6
      %v1040 = vrot.slane %v1039, 4
      %v1041 = vrot.slane %v1003, 6
      %v1042 = vsel %vm1034, %v1040, %v1041
      %v1043 = vrot.slane %v1004, 6
      %v1044 = vrot.slane %v1043, 4
      %v1045 = vrot.slane %v1005, 6
      %v1046 = vsel %vm1034, %v1044, %v1045
      %v1047 = vrot.slane %v1006, 6
      %v1048 = vrot.slane %v1047, 4
      %v1049 = vrot.slane %v1007, 6
      %v1050 = vsel %vm1034, %v1048, %v1049
      %v1051 = vrot.slane %v1008, 6
      %v1052 = vrot.slane %v1051, 4
      %v1053 = vrot.slane %v1009, 6
      %v1054 = vsel %vm1034, %v1052, %v1053
      %v1055 = vrot.slane %v1010, 6
      %v1056 = vrot.slane %v1055, 4
      %v1057 = vrot.slane %v1011, 6
      %v1058 = vsel %vm1034, %v1056, %v1057
      %v1059 = vrot.slane %v1012, 6
      %v1060 = vrot.slane %v1059, 4
      %v1061 = vrot.slane %v1013, 6
      %v1062 = vsel %vm1034, %v1060, %v1061
      %v1063 = vrot.slane %v1014, 6
      %v1064 = vrot.slane %v1063, 4
      %v1065 = vrot.slane %v1015, 6
      %v1066 = vsel %vm1034, %v1064, %v1065
      %1075 = vst.msk [vmem:[#allocation2 + $0x18] sm:$0xf] %vm262, %v1038
      %1076 = vst.msk [vmem:[#allocation2 + $0x3c] sm:$0xf] %vm262, %v1042
      %1077 = vst.msk [vmem:[#allocation2 + $0x60] sm:$0xf] %vm262, %v1046
      %1078 = vst.msk [vmem:[#allocation2 + $0x84] sm:$0xf] %vm262, %v1050
      %1079 = vst.msk [vmem:[#allocation2 + $0xa8] sm:$0xf] %vm262, %v1054
      %1080 = vst.msk [vmem:[#allocation2 + $0xcc] sm:$0xf] %vm262, %v1058
      %1081 = vst.msk [vmem:[#allocation2 + $0xf0] sm:$0xf] %vm262, %v1062
      %1082 = vst.msk [vmem:[#allocation2 + $0x114] sm:$0xf] %vm262, %v1066
      %v1083 = vld [vmem:[%s201 + $0x14] sm:$0xc]
      %v1084 = vld [vmem:[%s201 + $0x18] sm:$0x7]
      %v1085 = vld [vmem:[%s201 + $0x30] sm:$0xc]
      %v1086 = vld [vmem:[%s201 + $0x34] sm:$0x7]
      %v1087 = vld [vmem:[%s201 + $0x4c] sm:$0xc]
      %v1088 = vld [vmem:[%s201 + $0x50] sm:$0x7]
      %v1089 = vld [vmem:[%s201 + $0x68] sm:$0xc]
      %v1090 = vld [vmem:[%s201 + $0x6c] sm:$0x7]
      %v1091 = vld [vmem:[%s201 + $0x84] sm:$0xc]
      %v1092 = vld [vmem:[%s201 + $0x88] sm:$0x7]
      %v1093 = vld [vmem:[%s201 + $0xa0] sm:$0xc]
      %v1094 = vld [vmem:[%s201 + $0xa4] sm:$0x7]
      %v1095 = vld [vmem:[%s201 + $0xbc] sm:$0xc]
      %v1096 = vld [vmem:[%s201 + $0xc0] sm:$0x7]
      %v1097 = vld [vmem:[%s201 + $0xd8] sm:$0xc]
      %v1098 = vld [vmem:[%s201 + $0xdc] sm:$0x7]
      %vm1099 = vsmask.f32 1280
      %vm1100 = vsmask.f32 5392
      %vm1101 = vmor %vm1099, %vm1100
      %v1103 = vshrl.u32 %v1083, 16
      %v1105 = vrot.slane %v1103, 6
      %v1106 = vshll.u32 %v1083, 16
      %v1108 = vrot.slane %v1106, 7
      %v1109 = vor.u32 %v1105, %v1108
      %v1110 = vrot.slane %v1109, 4
      %v1112 = vshrl.u32 %v1084, 16
      %v1114 = vrot.slane %v1112, 6
      %v1115 = vshll.u32 %v1084, 16
      %v1117 = vrot.slane %v1115, 7
      %v1118 = vor.u32 %v1114, %v1117
      %v1119 = vsel %vm1101, %v1110, %v1118
      %v1121 = vshrl.u32 %v1085, 16
      %v1123 = vrot.slane %v1121, 6
      %v1124 = vshll.u32 %v1085, 16
      %v1126 = vrot.slane %v1124, 7
      %v1127 = vor.u32 %v1123, %v1126
      %v1128 = vrot.slane %v1127, 4
      %v1130 = vshrl.u32 %v1086, 16
      %v1132 = vrot.slane %v1130, 6
      %v1133 = vshll.u32 %v1086, 16
      %v1135 = vrot.slane %v1133, 7
      %v1136 = vor.u32 %v1132, %v1135
      %v1137 = vsel %vm1101, %v1128, %v1136
      %v1139 = vshrl.u32 %v1087, 16
      %v1141 = vrot.slane %v1139, 6
      %v1142 = vshll.u32 %v1087, 16
      %v1144 = vrot.slane %v1142, 7
      %v1145 = vor.u32 %v1141, %v1144
      %v1146 = vrot.slane %v1145, 4
      %v1148 = vshrl.u32 %v1088, 16
      %v1150 = vrot.slane %v1148, 6
      %v1151 = vshll.u32 %v1088, 16
      %v1153 = vrot.slane %v1151, 7
      %v1154 = vor.u32 %v1150, %v1153
      %v1155 = vsel %vm1101, %v1146, %v1154
      %v1157 = vshrl.u32 %v1089, 16
      %v1159 = vrot.slane %v1157, 6
      %v1160 = vshll.u32 %v1089, 16
      %v1162 = vrot.slane %v1160, 7
      %v1163 = vor.u32 %v1159, %v1162
      %v1164 = vrot.slane %v1163, 4
      %v1166 = vshrl.u32 %v1090, 16
      %v1168 = vrot.slane %v1166, 6
      %v1169 = vshll.u32 %v1090, 16
      %v1171 = vrot.slane %v1169, 7
      %v1172 = vor.u32 %v1168, %v1171
      %v1173 = vsel %vm1101, %v1164, %v1172
      %v1175 = vshrl.u32 %v1091, 16
      %v1177 = vrot.slane %v1175, 6
      %v1178 = vshll.u32 %v1091, 16
      %v1180 = vrot.slane %v1178, 7
      %v1181 = vor.u32 %v1177, %v1180
      %v1182 = vrot.slane %v1181, 4
      %v1184 = vshrl.u32 %v1092, 16
      %v1186 = vrot.slane %v1184, 6
      %v1187 = vshll.u32 %v1092, 16
      %v1189 = vrot.slane %v1187, 7
      %v1190 = vor.u32 %v1186, %v1189
      %v1191 = vsel %vm1101, %v1182, %v1190
      %v1193 = vshrl.u32 %v1093, 16
      %v1195 = vrot.slane %v1193, 6
      %v1196 = vshll.u32 %v1093, 16
      %v1198 = vrot.slane %v1196, 7
      %v1199 = vor.u32 %v1195, %v1198
      %v1200 = vrot.slane %v1199, 4
      %v1202 = vshrl.u32 %v1094, 16
      %v1204 = vrot.slane %v1202, 6
      %v1205 = vshll.u32 %v1094, 16
      %v1207 = vrot.slane %v1205, 7
      %v1208 = vor.u32 %v1204, %v1207
      %v1209 = vsel %vm1101, %v1200, %v1208
      %v1211 = vshrl.u32 %v1095, 16
      %v1213 = vrot.slane %v1211, 6
      %v1214 = vshll.u32 %v1095, 16
      %v1216 = vrot.slane %v1214, 7
      %v1217 = vor.u32 %v1213, %v1216
      %v1218 = vrot.slane %v1217, 4
      %v1220 = vshrl.u32 %v1096, 16
      %v1222 = vrot.slane %v1220, 6
      %v1223 = vshll.u32 %v1096, 16
      %v1225 = vrot.slane %v1223, 7
      %v1226 = vor.u32 %v1222, %v1225
      %v1227 = vsel %vm1101, %v1218, %v1226
      %v1229 = vshrl.u32 %v1097, 16
      %v1231 = vrot.slane %v1229, 6
      %v1232 = vshll.u32 %v1097, 16
      %v1234 = vrot.slane %v1232, 7
      %v1235 = vor.u32 %v1231, %v1234
      %v1236 = vrot.slane %v1235, 4
      %v1238 = vshrl.u32 %v1098, 16
      %v1240 = vrot.slane %v1238, 6
      %v1241 = vshll.u32 %v1098, 16
      %v1243 = vrot.slane %v1241, 7
      %v1244 = vor.u32 %v1240, %v1243
      %v1245 = vsel %vm1101, %v1236, %v1244
      %1254 = vst.msk [vmem:[#allocation2 + $0x1c] sm:$0xf] %vm262, %v1119
      %1255 = vst.msk [vmem:[#allocation2 + $0x40] sm:$0xf] %vm262, %v1137
      %1256 = vst.msk [vmem:[#allocation2 + $0x64] sm:$0xf] %vm262, %v1155
      %1257 = vst.msk [vmem:[#allocation2 + $0x88] sm:$0xf] %vm262, %v1173
      %1258 = vst.msk [vmem:[#allocation2 + $0xac] sm:$0xf] %vm262, %v1191
      %1259 = vst.msk [vmem:[#allocation2 + $0xd0] sm:$0xf] %vm262, %v1209
      %1260 = vst.msk [vmem:[#allocation2 + $0xf4] sm:$0xf] %vm262, %v1227
      %1261 = vst.msk [vmem:[#allocation2 + $0x118] sm:$0xf] %vm262, %v1245
      %v1262 = vld [vmem:[%s201 + $0x10] sm:$0xc]
      %v1263 = vld [vmem:[%s201 + $0x14] sm:$0x7]
      %v1264 = vld [vmem:[%s201 + $0x2c] sm:$0xc]
      %v1265 = vld [vmem:[%s201 + $0x30] sm:$0x7]
      %v1266 = vld [vmem:[%s201 + $0x48] sm:$0xc]
      %v1267 = vld [vmem:[%s201 + $0x4c] sm:$0x7]
      %v1268 = vld [vmem:[%s201 + $0x64] sm:$0xc]
      %v1269 = vld [vmem:[%s201 + $0x68] sm:$0x7]
      %v1270 = vld [vmem:[%s201 + $0x80] sm:$0xc]
      %v1271 = vld [vmem:[%s201 + $0x84] sm:$0x7]
      %v1272 = vld [vmem:[%s201 + $0x9c] sm:$0xc]
      %v1273 = vld [vmem:[%s201 + $0xa0] sm:$0x7]
      %v1274 = vld [vmem:[%s201 + $0xb8] sm:$0xc]
      %v1275 = vld [vmem:[%s201 + $0xbc] sm:$0x7]
      %v1276 = vld [vmem:[%s201 + $0xd4] sm:$0xc]
      %v1277 = vld [vmem:[%s201 + $0xd8] sm:$0x7]
      %v1279 = vshrl.u32 %v1262, 16
      %v1281 = vrot.slane %v1279, 6
      %v1282 = vshll.u32 %v1262, 16
      %v1284 = vrot.slane %v1282, 7
      %v1285 = vor.u32 %v1281, %v1284
      %v1286 = vrot.slane %v1285, 4
      %v1288 = vshrl.u32 %v1263, 16
      %v1290 = vrot.slane %v1288, 6
      %v1291 = vshll.u32 %v1263, 16
      %v1293 = vrot.slane %v1291, 7
      %v1294 = vor.u32 %v1290, %v1293
      %v1295 = vsel %vm1101, %v1286, %v1294
      %v1297 = vshrl.u32 %v1264, 16
      %v1299 = vrot.slane %v1297, 6
      %v1300 = vshll.u32 %v1264, 16
      %v1302 = vrot.slane %v1300, 7
      %v1303 = vor.u32 %v1299, %v1302
      %v1304 = vrot.slane %v1303, 4
      %v1306 = vshrl.u32 %v1265, 16
      %v1308 = vrot.slane %v1306, 6
      %v1309 = vshll.u32 %v1265, 16
      %v1311 = vrot.slane %v1309, 7
      %v1312 = vor.u32 %v1308, %v1311
      %v1313 = vsel %vm1101, %v1304, %v1312
      %v1315 = vshrl.u32 %v1266, 16
      %v1317 = vrot.slane %v1315, 6
      %v1318 = vshll.u32 %v1266, 16
      %v1320 = vrot.slane %v1318, 7
      %v1321 = vor.u32 %v1317, %v1320
      %v1322 = vrot.slane %v1321, 4
      %v1324 = vshrl.u32 %v1267, 16
      %v1326 = vrot.slane %v1324, 6
      %v1327 = vshll.u32 %v1267, 16
      %v1329 = vrot.slane %v1327, 7
      %v1330 = vor.u32 %v1326, %v1329
      %v1331 = vsel %vm1101, %v1322, %v1330
      %v1333 = vshrl.u32 %v1268, 16
      %v1335 = vrot.slane %v1333, 6
      %v1336 = vshll.u32 %v1268, 16
      %v1338 = vrot.slane %v1336, 7
      %v1339 = vor.u32 %v1335, %v1338
      %v1340 = vrot.slane %v1339, 4
      %v1342 = vshrl.u32 %v1269, 16
      %v1344 = vrot.slane %v1342, 6
      %v1345 = vshll.u32 %v1269, 16
      %v1347 = vrot.slane %v1345, 7
      %v1348 = vor.u32 %v1344, %v1347
      %v1349 = vsel %vm1101, %v1340, %v1348
      %v1351 = vshrl.u32 %v1270, 16
      %v1353 = vrot.slane %v1351, 6
      %v1354 = vshll.u32 %v1270, 16
      %v1356 = vrot.slane %v1354, 7
      %v1357 = vor.u32 %v1353, %v1356
      %v1358 = vrot.slane %v1357, 4
      %v1360 = vshrl.u32 %v1271, 16
      %v1362 = vrot.slane %v1360, 6
      %v1363 = vshll.u32 %v1271, 16
      %v1365 = vrot.slane %v1363, 7
      %v1366 = vor.u32 %v1362, %v1365
      %v1367 = vsel %vm1101, %v1358, %v1366
      %v1369 = vshrl.u32 %v1272, 16
      %v1371 = vrot.slane %v1369, 6
      %v1372 = vshll.u32 %v1272, 16
      %v1374 = vrot.slane %v1372, 7
      %v1375 = vor.u32 %v1371, %v1374
      %v1376 = vrot.slane %v1375, 4
      %v1378 = vshrl.u32 %v1273, 16
      %v1380 = vrot.slane %v1378, 6
      %v1381 = vshll.u32 %v1273, 16
      %v1383 = vrot.slane %v1381, 7
      %v1384 = vor.u32 %v1380, %v1383
      %v1385 = vsel %vm1101, %v1376, %v1384
      %v1387 = vshrl.u32 %v1274, 16
      %v1389 = vrot.slane %v1387, 6
      %v1390 = vshll.u32 %v1274, 16
      %v1392 = vrot.slane %v1390, 7
      %v1393 = vor.u32 %v1389, %v1392
      %v1394 = vrot.slane %v1393, 4
      %v1396 = vshrl.u32 %v1275, 16
      %v1398 = vrot.slane %v1396, 6
      %v1399 = vshll.u32 %v1275, 16
      %v1401 = vrot.slane %v1399, 7
      %v1402 = vor.u32 %v1398, %v1401
      %v1403 = vsel %vm1101, %v1394, %v1402
      %v1405 = vshrl.u32 %v1276, 16
      %v1407 = vrot.slane %v1405, 6
      %v1408 = vshll.u32 %v1276, 16
      %v1410 = vrot.slane %v1408, 7
      %v1411 = vor.u32 %v1407, %v1410
      %v1412 = vrot.slane %v1411, 4
      %v1414 = vshrl.u32 %v1277, 16
      %v1416 = vrot.slane %v1414, 6
      %v1417 = vshll.u32 %v1277, 16
      %v1419 = vrot.slane %v1417, 7
      %v1420 = vor.u32 %v1416, %v1419
      %v1421 = vsel %vm1101, %v1412, %v1420
      %1430 = vst.msk [vmem:[#allocation2 + $0x20] sm:$0xf] %vm262, %v1295
      %1431 = vst.msk [vmem:[#allocation2 + $0x44] sm:$0xf] %vm262, %v1313
      %1432 = vst.msk [vmem:[#allocation2 + $0x68] sm:$0xf] %vm262, %v1331
      %1433 = vst.msk [vmem:[#allocation2 + $0x8c] sm:$0xf] %vm262, %v1349
      %1434 = vst.msk [vmem:[#allocation2 + $0xb0] sm:$0xf] %vm262, %v1367
      %1435 = vst.msk [vmem:[#allocation2 + $0xd4] sm:$0xf] %vm262, %v1385
      %1436 = vst.msk [vmem:[#allocation2 + $0xf8] sm:$0xf] %vm262, %v1403
      %1437 = vst.msk [vmem:[#allocation2 + $0x11c] sm:$0xf] %vm262, %v1421
      %v1438 = vld [vmem:[#allocation2] sm:$0xff]
      %v1439 = vld [vmem:[#allocation2 + $0x8] sm:$0xff]
      %v1440 = vld [vmem:[#allocation2 + $0x10] sm:$0xff]
      %v1441 = vld [vmem:[#allocation2 + $0x18] sm:$0xff]
      %v1442 = vld [vmem:[#allocation2 + $0x20] sm:$0xf]
      %v1443 = vld [vmem:[#allocation2 + $0x24] sm:$0xff]
      %v1444 = vld [vmem:[#allocation2 + $0x2c] sm:$0xff]
      %v1445 = vld [vmem:[#allocation2 + $0x34] sm:$0xff]
      %v1446 = vld [vmem:[#allocation2 + $0x3c] sm:$0xff]
      %v1447 = vld [vmem:[#allocation2 + $0x44] sm:$0xf]
      %v1448 = vld [vmem:[#allocation2 + $0x48] sm:$0xff]
      %v1449 = vld [vmem:[#allocation2 + $0x50] sm:$0xff]
      %v1450 = vld [vmem:[#allocation2 + $0x58] sm:$0xff]
      %v1451 = vld [vmem:[#allocation2 + $0x60] sm:$0xff]
      %v1452 = vld [vmem:[#allocation2 + $0x68] sm:$0xf]
      %v1453 = vld [vmem:[#allocation2 + $0x6c] sm:$0xff]
      %v1454 = vld [vmem:[#allocation2 + $0x74] sm:$0xff]
      %v1455 = vld [vmem:[#allocation2 + $0x7c] sm:$0xff]
      %v1456 = vld [vmem:[#allocation2 + $0x84] sm:$0xff]
      %v1457 = vld [vmem:[#allocation2 + $0x8c] sm:$0xf]
      %v1458 = vld [vmem:[#allocation2 + $0x90] sm:$0xff]
      %v1459 = vld [vmem:[#allocation2 + $0x98] sm:$0xff]
      %v1460 = vld [vmem:[#allocation2 + $0xa0] sm:$0xff]
      %v1461 = vld [vmem:[#allocation2 + $0xa8] sm:$0xff]
      %v1462 = vld [vmem:[#allocation2 + $0xb0] sm:$0xf]
      %v1463 = vld [vmem:[#allocation2 + $0xb4] sm:$0xff]
      %v1464 = vld [vmem:[#allocation2 + $0xbc] sm:$0xff]
      %v1465 = vld [vmem:[#allocation2 + $0xc4] sm:$0xff]
      %v1466 = vld [vmem:[#allocation2 + $0xcc] sm:$0xff]
      %v1467 = vld [vmem:[#allocation2 + $0xd4] sm:$0xf]
      %v1468 = vld [vmem:[#allocation2 + $0xd8] sm:$0xff]
      %v1469 = vld [vmem:[#allocation2 + $0xe0] sm:$0xff]
      %v1470 = vld [vmem:[#allocation2 + $0xe8] sm:$0xff]
      %v1471 = vld [vmem:[#allocation2 + $0xf0] sm:$0xff]
      %v1472 = vld [vmem:[#allocation2 + $0xf8] sm:$0xf]
      %v1473 = vld [vmem:[#allocation2 + $0xfc] sm:$0xff]
      %v1474 = vld [vmem:[#allocation2 + $0x104] sm:$0xff]
      %v1475 = vld [vmem:[#allocation2 + $0x10c] sm:$0xff]
      %v1476 = vld [vmem:[#allocation2 + $0x114] sm:$0xff]
      %v1477 = vld [vmem:[#allocation2 + $0x11c] sm:$0xf]
      %v1478 = vld [vmem:[%s1] sm:$0xf]
      %v1479 = vld [vmem:[%s1 + $0x4] sm:$0xf]
      %v1480 = vld [vmem:[%s1 + $0x8] sm:$0xf]
      %v1481 = vld [vmem:[%s1 + $0xc] sm:$0xf]
      %v1482 = vld [vmem:[%s1 + $0x10] sm:$0xf]
      %v1483 = vld [vmem:[%s1 + $0x14] sm:$0xf]
      %v1484 = vld [vmem:[%s1 + $0x18] sm:$0xf]
      %v1485 = vld [vmem:[%s1 + $0x1c] sm:$0xf]
      %v1486 = vld [vmem:[%s1 + $0x20] sm:$0xf]
      %v1487 = vld [vmem:[%s1 + $0x24] sm:$0xf]
      %v1488 = vld [vmem:[%s1 + $0x28] sm:$0xf]
      %v1489 = vld [vmem:[%s1 + $0x2c] sm:$0xf]
      %v1490 = vld [vmem:[%s1 + $0x30] sm:$0xf]
      %v1491 = vld [vmem:[%s1 + $0x34] sm:$0xf]
      %v1492 = vld [vmem:[%s1 + $0x38] sm:$0xf]
      %v1493 = vld [vmem:[%s1 + $0x3c] sm:$0xf]
      %v1494 = vld [vmem:[%s1 + $0x40] sm:$0xf]
      %v1495 = vld [vmem:[%s1 + $0x44] sm:$0xf]
      %v1496 = vld [vmem:[%s1 + $0x48] sm:$0xf]
      %v1497 = vld [vmem:[%s1 + $0x4c] sm:$0xf]
      %v1498 = vld [vmem:[%s1 + $0x50] sm:$0xf]
      %v1499 = vld [vmem:[%s1 + $0x54] sm:$0xf]
      %v1500 = vld [vmem:[%s1 + $0x58] sm:$0xf]
      %v1501 = vld [vmem:[%s1 + $0x5c] sm:$0xf]
      %v1502 = vld [vmem:[%s1 + $0x60] sm:$0xf]
      %v1503 = vld [vmem:[%s1 + $0x64] sm:$0xf]
      %v1504 = vld [vmem:[%s1 + $0x68] sm:$0xf]
      %v1505 = vld [vmem:[%s1 + $0x6c] sm:$0xf]
      %v1506 = vld [vmem:[%s1 + $0x70] sm:$0xf]
      %v1507 = vld [vmem:[%s1 + $0x74] sm:$0xf]
      %v1508 = vld [vmem:[%s1 + $0x78] sm:$0xf]
      %v1509 = vld [vmem:[%s1 + $0x7c] sm:$0xf]
      %v1510 = vld [vmem:[%s1 + $0x80] sm:$0xf]
      %v1511 = vld [vmem:[%s1 + $0x84] sm:$0xf]
      %v1512 = vld [vmem:[%s1 + $0x88] sm:$0xf]
      %v1513 = vld [vmem:[%s1 + $0x8c] sm:$0xf]
      %v1514 = vld [vmem:[%s1 + $0x90] sm:$0xf]
      %v1515 = vld [vmem:[%s1 + $0x94] sm:$0xf]
      %v1516 = vld [vmem:[%s1 + $0x98] sm:$0xf]
      %v1517 = vld [vmem:[%s1 + $0x9c] sm:$0xf]
      %v1518 = vld [vmem:[%s1 + $0xa0] sm:$0xf]
      %v1519 = vld [vmem:[%s1 + $0xa4] sm:$0xf]
      %v1520 = vld [vmem:[%s1 + $0xa8] sm:$0xf]
      %v1521 = vld [vmem:[%s1 + $0xac] sm:$0xf]
      %v1522 = vld [vmem:[%s1 + $0xb0] sm:$0xf]
      %v1523 = vld [vmem:[%s1 + $0xb4] sm:$0xf]
      %v1524 = vld [vmem:[%s1 + $0xb8] sm:$0xf]
      %v1525 = vld [vmem:[%s1 + $0xbc] sm:$0xf]
      %v1526 = vld [vmem:[%s1 + $0xc0] sm:$0xf]
      %v1527 = vld [vmem:[%s1 + $0xc4] sm:$0xf]
      %v1528 = vld [vmem:[%s1 + $0xc8] sm:$0xf]
      %v1529 = vld [vmem:[%s1 + $0xcc] sm:$0xf]
      %v1530 = vld [vmem:[%s1 + $0xd0] sm:$0xf]
      %v1531 = vld [vmem:[%s1 + $0xd4] sm:$0xf]
      %v1532 = vld [vmem:[%s1 + $0xd8] sm:$0xf]
      %v1533 = vld [vmem:[%s1 + $0xdc] sm:$0xf]
      %v1534 = vld [vmem:[%s1 + $0xe0] sm:$0xf]
      %v1535 = vld [vmem:[%s1 + $0xe4] sm:$0xf]
      %v1536 = vld [vmem:[%s1 + $0xe8] sm:$0xf]
      %v1537 = vld [vmem:[%s1 + $0xec] sm:$0xf]
      %v1538 = vld [vmem:[%s1 + $0xf0] sm:$0xf]
      %v1539 = vld [vmem:[%s1 + $0xf4] sm:$0xf]
      %v1540 = vld [vmem:[%s1 + $0xf8] sm:$0xf]
      %v1541 = vld [vmem:[%s1 + $0xfc] sm:$0xf]
      %v1542 = vld [vmem:[%s1 + $0x100] sm:$0xf]
      %v1543 = vld [vmem:[%s1 + $0x104] sm:$0xf]
      %v1544 = vld [vmem:[%s1 + $0x108] sm:$0xf]
      %v1545 = vld [vmem:[%s1 + $0x10c] sm:$0xf]
      %v1546 = vld [vmem:[%s1 + $0x110] sm:$0xf]
      %v1547 = vld [vmem:[%s1 + $0x114] sm:$0xf]
      %v1548 = vld [vmem:[%s1 + $0x118] sm:$0xf]
      %v1549 = vld [vmem:[%s1 + $0x11c] sm:$0xf]
      %v1550 = vld [vmem:[%s1 + $0x120] sm:$0xf]
      %v1551 = vld [vmem:[%s1 + $0x124] sm:$0xf]
      %v1552 = vld [vmem:[%s1 + $0x128] sm:$0xf]
      %v1553 = vld [vmem:[%s1 + $0x12c] sm:$0xf]
      %v1554 = vld [vmem:[%s1 + $0x130] sm:$0xf]
      %v1555 = vld [vmem:[%s1 + $0x134] sm:$0xf]
      %v1556 = vld [vmem:[%s1 + $0x138] sm:$0xf]
      %v1557 = vld [vmem:[%s1 + $0x13c] sm:$0xf]
      %v1558 = vld [vmem:[%s1 + $0x140] sm:$0xf]
      %v1559 = vld [vmem:[%s1 + $0x144] sm:$0xf]
      %v1560 = vld [vmem:[%s1 + $0x148] sm:$0xf]
      %v1561 = vld [vmem:[%s1 + $0x14c] sm:$0xf]
      %v1562 = vld [vmem:[%s1 + $0x150] sm:$0xf]
      %v1563 = vld [vmem:[%s1 + $0x154] sm:$0xf]
      %v1564 = vld [vmem:[%s1 + $0x158] sm:$0xf]
      %v1565 = vld [vmem:[%s1 + $0x15c] sm:$0xf]
      %v1566 = vld [vmem:[%s1 + $0x160] sm:$0xf]
      %v1567 = vld [vmem:[%s1 + $0x164] sm:$0xf]
      %v1568 = vld [vmem:[%s1 + $0x168] sm:$0xf]
      %v1569 = vld [vmem:[%s1 + $0x16c] sm:$0xf]
      %v1570 = vld [vmem:[%s1 + $0x170] sm:$0xf]
      %v1571 = vld [vmem:[%s1 + $0x174] sm:$0xf]
      %v1572 = vld [vmem:[%s1 + $0x178] sm:$0xf]
      %v1573 = vld [vmem:[%s1 + $0x17c] sm:$0xf]
      %v1574 = vld [vmem:[%s1 + $0x180] sm:$0xf]
      %v1575 = vld [vmem:[%s1 + $0x184] sm:$0xf]
      %v1576 = vld [vmem:[%s1 + $0x188] sm:$0xf]
      %v1577 = vld [vmem:[%s1 + $0x18c] sm:$0xf]
      %v1578 = vld [vmem:[%s1 + $0x190] sm:$0xf]
      %v1579 = vld [vmem:[%s1 + $0x194] sm:$0xf]
      %v1580 = vld [vmem:[%s1 + $0x198] sm:$0xf]
      %v1581 = vld [vmem:[%s1 + $0x19c] sm:$0xf]
      %v1582 = vld [vmem:[%s1 + $0x1a0] sm:$0xf]
      %v1583 = vld [vmem:[%s1 + $0x1a4] sm:$0xf]
      %v1584 = vld [vmem:[%s1 + $0x1a8] sm:$0xf]
      %v1585 = vld [vmem:[%s1 + $0x1ac] sm:$0xf]
      %v1586 = vld [vmem:[%s1 + $0x1b0] sm:$0xf]
      %v1587 = vld [vmem:[%s1 + $0x1b4] sm:$0xf]
      %v1588 = vld [vmem:[%s1 + $0x1b8] sm:$0xf]
      %v1589 = vld [vmem:[%s1 + $0x1bc] sm:$0xf]
      %v1590 = vld [vmem:[%s1 + $0x1c0] sm:$0xf]
      %v1591 = vld [vmem:[%s1 + $0x1c4] sm:$0xf]
      %v1592 = vld [vmem:[%s1 + $0x1c8] sm:$0xf]
      %v1593 = vld [vmem:[%s1 + $0x1cc] sm:$0xf]
      %v1594 = vld [vmem:[%s1 + $0x1d0] sm:$0xf]
      %v1595 = vld [vmem:[%s1 + $0x1d4] sm:$0xf]
      %v1596 = vld [vmem:[%s1 + $0x1d8] sm:$0xf]
      %v1597 = vld [vmem:[%s1 + $0x1dc] sm:$0xf]
      %v1598 = vld [vmem:[%s1 + $0x1e0] sm:$0xf]
      %v1599 = vld [vmem:[%s1 + $0x1e4] sm:$0xf]
      %v1600 = vld [vmem:[%s1 + $0x1e8] sm:$0xf]
      %v1601 = vld [vmem:[%s1 + $0x1ec] sm:$0xf]
      %v1602 = vld [vmem:[%s1 + $0x1f0] sm:$0xf]
      %v1603 = vld [vmem:[%s1 + $0x1f4] sm:$0xf]
      %v1604 = vld [vmem:[%s1 + $0x1f8] sm:$0xf]
      %v1605 = vld [vmem:[%s1 + $0x1fc] sm:$0xf]
      %v1606 = vld [vmem:[%s1 + $0x200] sm:$0xf]
      %v1607 = vld [vmem:[%s1 + $0x204] sm:$0xf]
      %v1608 = vld [vmem:[%s1 + $0x208] sm:$0xf]
      %v1609 = vld [vmem:[%s1 + $0x20c] sm:$0xf]
      %v1610 = vld [vmem:[%s1 + $0x210] sm:$0xf]
      %v1611 = vld [vmem:[%s1 + $0x214] sm:$0xf]
      %v1612 = vld [vmem:[%s1 + $0x218] sm:$0xf]
      %v1613 = vld [vmem:[%s1 + $0x21c] sm:$0xf]
      %v1614 = vld [vmem:[%s1 + $0x220] sm:$0xf]
      %v1615 = vld [vmem:[%s1 + $0x224] sm:$0xf]
      %v1616 = vld [vmem:[%s1 + $0x228] sm:$0xf]
      %v1617 = vld [vmem:[%s1 + $0x22c] sm:$0xf]
      %v1618 = vld [vmem:[%s1 + $0x230] sm:$0xf]
      %v1619 = vld [vmem:[%s1 + $0x234] sm:$0xf]
      %v1620 = vld [vmem:[%s1 + $0x238] sm:$0xf]
      %v1621 = vld [vmem:[%s1 + $0x23c] sm:$0xf]
      %v1622 = vld [vmem:[%s2] sm:$0x1]
      %v1624 = vperm.slane %v1622, 0
      %v1666 = vunpack.c.l.b16 %v1438
      %v1667 = vunpack.c.h.b16 %v1438
      %v1668 = vunpack.c.l.b16 %v1439
      %v1669 = vunpack.c.h.b16 %v1439
      %v1670 = vunpack.c.l.b16 %v1440
      %v1671 = vunpack.c.h.b16 %v1440
      %v1672 = vunpack.c.l.b16 %v1441
      %v1673 = vunpack.c.h.b16 %v1441
      %v1674 = vunpack.c.l.b16 %v1442
      %v1675 = vunpack.c.l.b16 %v1443
      %v1676 = vunpack.c.h.b16 %v1443
      %v1677 = vunpack.c.l.b16 %v1444
      %v1678 = vunpack.c.h.b16 %v1444
      %v1679 = vunpack.c.l.b16 %v1445
      %v1680 = vunpack.c.h.b16 %v1445
      %v1681 = vunpack.c.l.b16 %v1446
      %v1682 = vunpack.c.h.b16 %v1446
      %v1683 = vunpack.c.l.b16 %v1447
      %v1684 = vunpack.c.l.b16 %v1448
      %v1685 = vunpack.c.h.b16 %v1448
      %v1686 = vunpack.c.l.b16 %v1449
      %v1687 = vunpack.c.h.b16 %v1449
      %v1688 = vunpack.c.l.b16 %v1450
      %v1689 = vunpack.c.h.b16 %v1450
      %v1690 = vunpack.c.l.b16 %v1451
      %v1691 = vunpack.c.h.b16 %v1451
      %v1692 = vunpack.c.l.b16 %v1452
      %v1693 = vunpack.c.l.b16 %v1453
      %v1694 = vunpack.c.h.b16 %v1453
      %v1695 = vunpack.c.l.b16 %v1454
      %v1696 = vunpack.c.h.b16 %v1454
      %v1697 = vunpack.c.l.b16 %v1455
      %v1698 = vunpack.c.h.b16 %v1455
      %v1699 = vunpack.c.l.b16 %v1456
      %v1700 = vunpack.c.h.b16 %v1456
      %v1701 = vunpack.c.l.b16 %v1457
      %v1702 = vunpack.c.l.b16 %v1458
      %v1703 = vunpack.c.h.b16 %v1458
      %v1704 = vunpack.c.l.b16 %v1459
      %v1705 = vunpack.c.h.b16 %v1459
      %v1706 = vunpack.c.l.b16 %v1460
      %v1707 = vunpack.c.h.b16 %v1460
      %v1708 = vunpack.c.l.b16 %v1461
      %v1709 = vunpack.c.h.b16 %v1461
      %v1710 = vunpack.c.l.b16 %v1462
      %v1711 = vunpack.c.l.b16 %v1463
      %v1712 = vunpack.c.h.b16 %v1463
      %v1713 = vunpack.c.l.b16 %v1464
      %v1714 = vunpack.c.h.b16 %v1464
      %v1715 = vunpack.c.l.b16 %v1465
      %v1716 = vunpack.c.h.b16 %v1465
      %v1717 = vunpack.c.l.b16 %v1466
      %v1718 = vunpack.c.h.b16 %v1466
      %v1719 = vunpack.c.l.b16 %v1467
      %v1720 = vunpack.c.l.b16 %v1468
      %v1721 = vunpack.c.h.b16 %v1468
      %v1722 = vunpack.c.l.b16 %v1469
      %v1723 = vunpack.c.h.b16 %v1469
      %v1724 = vunpack.c.l.b16 %v1470
      %v1725 = vunpack.c.h.b16 %v1470
      %v1726 = vunpack.c.l.b16 %v1471
      %v1727 = vunpack.c.h.b16 %v1471
      %v1728 = vunpack.c.l.b16 %v1472
      %v1729 = vunpack.c.l.b16 %v1473
      %v1730 = vunpack.c.h.b16 %v1473
      %v1731 = vunpack.c.l.b16 %v1474
      %v1732 = vunpack.c.h.b16 %v1474
      %v1733 = vunpack.c.l.b16 %v1475
      %v1734 = vunpack.c.h.b16 %v1475
      %v1735 = vunpack.c.l.b16 %v1476
      %v1736 = vunpack.c.h.b16 %v1476
      %v1737 = vunpack.c.l.b16 %v1477
      %v1738 = vpack.c.b16 %v1675, %v1666
      %v1739 = vpack.c.b16 %v1676, %v1667
      %v1740 = vpack.c.b16 %v1677, %v1668
      %v1741 = vpack.c.b16 %v1678, %v1669
      %v1742 = vpack.c.b16 %v1679, %v1670
      %v1743 = vpack.c.b16 %v1680, %v1671
      %v1744 = vpack.c.b16 %v1681, %v1672
      %v1745 = vpack.c.b16 %v1682, %v1673
      %v1746 = vpack.c.b16 %v1683, %v1674
      %v1747 = vpack.c.b16 %v1693, %v1684
      %v1748 = vpack.c.b16 %v1694, %v1685
      %v1749 = vpack.c.b16 %v1695, %v1686
      %v1750 = vpack.c.b16 %v1696, %v1687
      %v1751 = vpack.c.b16 %v1697, %v1688
      %v1752 = vpack.c.b16 %v1698, %v1689
      %v1753 = vpack.c.b16 %v1699, %v1690
      %v1754 = vpack.c.b16 %v1700, %v1691
      %v1755 = vpack.c.b16 %v1701, %v1692
      %v1756 = vpack.c.b16 %v1711, %v1702
      %v1757 = vpack.c.b16 %v1712, %v1703
      %v1758 = vpack.c.b16 %v1713, %v1704
      %v1759 = vpack.c.b16 %v1714, %v1705
      %v1760 = vpack.c.b16 %v1715, %v1706
      %v1761 = vpack.c.b16 %v1716, %v1707
      %v1762 = vpack.c.b16 %v1717, %v1708
      %v1763 = vpack.c.b16 %v1718, %v1709
      %v1764 = vpack.c.b16 %v1719, %v1710
      %v1765 = vpack.c.b16 %v1729, %v1720
      %v1766 = vpack.c.b16 %v1730, %v1721
      %v1767 = vpack.c.b16 %v1731, %v1722
      %v1768 = vpack.c.b16 %v1732, %v1723
      %v1769 = vpack.c.b16 %v1733, %v1724
      %v1770 = vpack.c.b16 %v1734, %v1725
      %v1771 = vpack.c.b16 %v1735, %v1726
      %v1772 = vpack.c.b16 %v1736, %v1727
      %v1773 = vpack.c.b16 %v1737, %v1728
      %v1954 = vunpack.c.l.b16 %v1478
      %v1955 = vunpack.c.l.b16 %v1479
      %v1956 = vunpack.c.l.b16 %v1480
      %v1957 = vunpack.c.l.b16 %v1481
      %v1958 = vunpack.c.l.b16 %v1482
      %v1959 = vunpack.c.l.b16 %v1483
      %v1960 = vunpack.c.l.b16 %v1484
      %v1961 = vunpack.c.l.b16 %v1485
      %v1962 = vunpack.c.l.b16 %v1486
      %v1963 = vunpack.c.l.b16 %v1487
      %v1964 = vunpack.c.l.b16 %v1488
      %v1965 = vunpack.c.l.b16 %v1489
      %v1966 = vunpack.c.l.b16 %v1490
      %v1967 = vunpack.c.l.b16 %v1491
      %v1968 = vunpack.c.l.b16 %v1492
      %v1969 = vunpack.c.l.b16 %v1493
      %v1970 = vunpack.c.l.b16 %v1494
      %v1971 = vunpack.c.l.b16 %v1495
      %v1972 = vunpack.c.l.b16 %v1496
      %v1973 = vunpack.c.l.b16 %v1497
      %v1974 = vunpack.c.l.b16 %v1498
      %v1975 = vunpack.c.l.b16 %v1499
      %v1976 = vunpack.c.l.b16 %v1500
      %v1977 = vunpack.c.l.b16 %v1501
      %v1978 = vunpack.c.l.b16 %v1502
      %v1979 = vunpack.c.l.b16 %v1503
      %v1980 = vunpack.c.l.b16 %v1504
      %v1981 = vunpack.c.l.b16 %v1505
      %v1982 = vunpack.c.l.b16 %v1506
      %v1983 = vunpack.c.l.b16 %v1507
      %v1984 = vunpack.c.l.b16 %v1508
      %v1985 = vunpack.c.l.b16 %v1509
      %v1986 = vunpack.c.l.b16 %v1510
      %v1987 = vunpack.c.l.b16 %v1511
      %v1988 = vunpack.c.l.b16 %v1512
      %v1989 = vunpack.c.l.b16 %v1513
      %v1990 = vunpack.c.l.b16 %v1514
      %v1991 = vunpack.c.l.b16 %v1515
      %v1992 = vunpack.c.l.b16 %v1516
      %v1993 = vunpack.c.l.b16 %v1517
      %v1994 = vunpack.c.l.b16 %v1518
      %v1995 = vunpack.c.l.b16 %v1519
      %v1996 = vunpack.c.l.b16 %v1520
      %v1997 = vunpack.c.l.b16 %v1521
      %v1998 = vunpack.c.l.b16 %v1522
      %v1999 = vunpack.c.l.b16 %v1523
      %v2000 = vunpack.c.l.b16 %v1524
      %v2001 = vunpack.c.l.b16 %v1525
      %v2002 = vunpack.c.l.b16 %v1526
      %v2003 = vunpack.c.l.b16 %v1527
      %v2004 = vunpack.c.l.b16 %v1528
      %v2005 = vunpack.c.l.b16 %v1529
      %v2006 = vunpack.c.l.b16 %v1530
      %v2007 = vunpack.c.l.b16 %v1531
      %v2008 = vunpack.c.l.b16 %v1532
      %v2009 = vunpack.c.l.b16 %v1533
      %v2010 = vunpack.c.l.b16 %v1534
      %v2011 = vunpack.c.l.b16 %v1535
      %v2012 = vunpack.c.l.b16 %v1536
      %v2013 = vunpack.c.l.b16 %v1537
      %v2014 = vunpack.c.l.b16 %v1538
      %v2015 = vunpack.c.l.b16 %v1539
      %v2016 = vunpack.c.l.b16 %v1540
      %v2017 = vunpack.c.l.b16 %v1541
      %v2018 = vunpack.c.l.b16 %v1542
      %v2019 = vunpack.c.l.b16 %v1543
      %v2020 = vunpack.c.l.b16 %v1544
      %v2021 = vunpack.c.l.b16 %v1545
      %v2022 = vunpack.c.l.b16 %v1546
      %v2023 = vunpack.c.l.b16 %v1547
      %v2024 = vunpack.c.l.b16 %v1548
      %v2025 = vunpack.c.l.b16 %v1549
      %v2026 = vunpack.c.l.b16 %v1550
      %v2027 = vunpack.c.l.b16 %v1551
      %v2028 = vunpack.c.l.b16 %v1552
      %v2029 = vunpack.c.l.b16 %v1553
      %v2030 = vunpack.c.l.b16 %v1554
      %v2031 = vunpack.c.l.b16 %v1555
      %v2032 = vunpack.c.l.b16 %v1556
      %v2033 = vunpack.c.l.b16 %v1557
      %v2034 = vunpack.c.l.b16 %v1558
      %v2035 = vunpack.c.l.b16 %v1559
      %v2036 = vunpack.c.l.b16 %v1560
      %v2037 = vunpack.c.l.b16 %v1561
      %v2038 = vunpack.c.l.b16 %v1562
      %v2039 = vunpack.c.l.b16 %v1563
      %v2040 = vunpack.c.l.b16 %v1564
      %v2041 = vunpack.c.l.b16 %v1565
      %v2042 = vunpack.c.l.b16 %v1566
      %v2043 = vunpack.c.l.b16 %v1567
      %v2044 = vunpack.c.l.b16 %v1568
      %v2045 = vunpack.c.l.b16 %v1569
      %v2046 = vunpack.c.l.b16 %v1570
      %v2047 = vunpack.c.l.b16 %v1571
      %v2048 = vunpack.c.l.b16 %v1572
      %v2049 = vunpack.c.l.b16 %v1573
      %v2050 = vunpack.c.l.b16 %v1574
      %v2051 = vunpack.c.l.b16 %v1575
      %v2052 = vunpack.c.l.b16 %v1576
      %v2053 = vunpack.c.l.b16 %v1577
      %v2054 = vunpack.c.l.b16 %v1578
      %v2055 = vunpack.c.l.b16 %v1579
      %v2056 = vunpack.c.l.b16 %v1580
      %v2057 = vunpack.c.l.b16 %v1581
      %v2058 = vunpack.c.l.b16 %v1582
      %v2059 = vunpack.c.l.b16 %v1583
      %v2060 = vunpack.c.l.b16 %v1584
      %v2061 = vunpack.c.l.b16 %v1585
      %v2062 = vunpack.c.l.b16 %v1586
      %v2063 = vunpack.c.l.b16 %v1587
      %v2064 = vunpack.c.l.b16 %v1588
      %v2065 = vunpack.c.l.b16 %v1589
      %v2066 = vunpack.c.l.b16 %v1590
      %v2067 = vunpack.c.l.b16 %v1591
      %v2068 = vunpack.c.l.b16 %v1592
      %v2069 = vunpack.c.l.b16 %v1593
      %v2070 = vunpack.c.l.b16 %v1594
      %v2071 = vunpack.c.l.b16 %v1595
      %v2072 = vunpack.c.l.b16 %v1596
      %v2073 = vunpack.c.l.b16 %v1597
      %v2074 = vunpack.c.l.b16 %v1598
      %v2075 = vunpack.c.l.b16 %v1599
      %v2076 = vunpack.c.l.b16 %v1600
      %v2077 = vunpack.c.l.b16 %v1601
      %v2078 = vunpack.c.l.b16 %v1602
      %v2079 = vunpack.c.l.b16 %v1603
      %v2080 = vunpack.c.l.b16 %v1604
      %v2081 = vunpack.c.l.b16 %v1605
      %v2082 = vunpack.c.l.b16 %v1606
      %v2083 = vunpack.c.l.b16 %v1607
      %v2084 = vunpack.c.l.b16 %v1608
      %v2085 = vunpack.c.l.b16 %v1609
      %v2086 = vunpack.c.l.b16 %v1610
      %v2087 = vunpack.c.l.b16 %v1611
      %v2088 = vunpack.c.l.b16 %v1612
      %v2089 = vunpack.c.l.b16 %v1613
      %v2090 = vunpack.c.l.b16 %v1614
      %v2091 = vunpack.c.l.b16 %v1615
      %v2092 = vunpack.c.l.b16 %v1616
      %v2093 = vunpack.c.l.b16 %v1617
      %v2094 = vunpack.c.l.b16 %v1618
      %v2095 = vunpack.c.l.b16 %v1619
      %v2096 = vunpack.c.l.b16 %v1620
      %v2097 = vunpack.c.l.b16 %v1621
      %v2098 = vpack.c.b16 %v1955, %v1954
      %v2099 = vpack.c.b16 %v1957, %v1956
      %v2100 = vpack.c.b16 %v1959, %v1958
      %v2101 = vpack.c.b16 %v1961, %v1960
      %v2102 = vpack.c.b16 %v1963, %v1962
      %v2103 = vpack.c.b16 %v1965, %v1964
      %v2104 = vpack.c.b16 %v1967, %v1966
      %v2105 = vpack.c.b16 %v1969, %v1968
      %v2106 = vpack.c.b16 %v1971, %v1970
      %v2107 = vpack.c.b16 %v1973, %v1972
      %v2108 = vpack.c.b16 %v1975, %v1974
      %v2109 = vpack.c.b16 %v1977, %v1976
      %v2110 = vpack.c.b16 %v1979, %v1978
      %v2111 = vpack.c.b16 %v1981, %v1980
      %v2112 = vpack.c.b16 %v1983, %v1982
      %v2113 = vpack.c.b16 %v1985, %v1984
      %v2114 = vpack.c.b16 %v1987, %v1986
      %v2115 = vpack.c.b16 %v1989, %v1988
      %v2116 = vpack.c.b16 %v1991, %v1990
      %v2117 = vpack.c.b16 %v1993, %v1992
      %v2118 = vpack.c.b16 %v1995, %v1994
      %v2119 = vpack.c.b16 %v1997, %v1996
      %v2120 = vpack.c.b16 %v1999, %v1998
      %v2121 = vpack.c.b16 %v2001, %v2000
      %v2122 = vpack.c.b16 %v2003, %v2002
      %v2123 = vpack.c.b16 %v2005, %v2004
      %v2124 = vpack.c.b16 %v2007, %v2006
      %v2125 = vpack.c.b16 %v2009, %v2008
      %v2126 = vpack.c.b16 %v2011, %v2010
      %v2127 = vpack.c.b16 %v2013, %v2012
      %v2128 = vpack.c.b16 %v2015, %v2014
      %v2129 = vpack.c.b16 %v2017, %v2016
      %v2130 = vpack.c.b16 %v2019, %v2018
      %v2131 = vpack.c.b16 %v2021, %v2020
      %v2132 = vpack.c.b16 %v2023, %v2022
      %v2133 = vpack.c.b16 %v2025, %v2024
      %v2134 = vpack.c.b16 %v2027, %v2026
      %v2135 = vpack.c.b16 %v2029, %v2028
      %v2136 = vpack.c.b16 %v2031, %v2030
      %v2137 = vpack.c.b16 %v2033, %v2032
      %v2138 = vpack.c.b16 %v2035, %v2034
      %v2139 = vpack.c.b16 %v2037, %v2036
      %v2140 = vpack.c.b16 %v2039, %v2038
      %v2141 = vpack.c.b16 %v2041, %v2040
      %v2142 = vpack.c.b16 %v2043, %v2042
      %v2143 = vpack.c.b16 %v2045, %v2044
      %v2144 = vpack.c.b16 %v2047, %v2046
      %v2145 = vpack.c.b16 %v2049, %v2048
      %v2146 = vpack.c.b16 %v2051, %v2050
      %v2147 = vpack.c.b16 %v2053, %v2052
      %v2148 = vpack.c.b16 %v2055, %v2054
      %v2149 = vpack.c.b16 %v2057, %v2056
      %v2150 = vpack.c.b16 %v2059, %v2058
      %v2151 = vpack.c.b16 %v2061, %v2060
      %v2152 = vpack.c.b16 %v2063, %v2062
      %v2153 = vpack.c.b16 %v2065, %v2064
      %v2154 = vpack.c.b16 %v2067, %v2066
      %v2155 = vpack.c.b16 %v2069, %v2068
      %v2156 = vpack.c.b16 %v2071, %v2070
      %v2157 = vpack.c.b16 %v2073, %v2072
      %v2158 = vpack.c.b16 %v2075, %v2074
      %v2159 = vpack.c.b16 %v2077, %v2076
      %v2160 = vpack.c.b16 %v2079, %v2078
      %v2161 = vpack.c.b16 %v2081, %v2080
      %v2162 = vpack.c.b16 %v2083, %v2082
      %v2163 = vpack.c.b16 %v2085, %v2084
      %v2164 = vpack.c.b16 %v2087, %v2086
      %v2165 = vpack.c.b16 %v2089, %v2088
      %v2166 = vpack.c.b16 %v2091, %v2090
      %v2167 = vpack.c.b16 %v2093, %v2092
      %v2168 = vpack.c.b16 %v2095, %v2094
      %v2169 = vpack.c.b16 %v2097, %v2096
      %2242 = vmatpush.bf16.msra.mxu0 %v2105
      %2243 = vmatpush.bf16.msra.mxu0 %v2104
      %2244 = vmatpush.bf16.msra.mxu0 %v2103
      %2245 = vmatpush.bf16.msra.mxu0 %v2102
      %2246 = vmatpush.bf16.msra.mxu0 %v2101
      %2247 = vmatpush.bf16.msra.mxu0 %v2100
      %2248 = vmatpush.bf16.msra.mxu0 %v2099
      %2249 = vmatpush.bf16.msra.mxu0 %v2098
      %2250 = vmatmul.bf16.gmra.mxu0 %v1738
      %v2251 = vpop.f32.mrf.mxu0
      %v2252 = vadd.f32 %v1624, %v2251
      %v2253 = vpop.f32.mrf.mxu0
      %v2254 = vadd.f32 %v1624, %v2253
      %2255 = vmatmul.bf16.gmra.mxu0 %v1747
      %v2256 = vpop.f32.mrf.mxu0
      %v2257 = vadd.f32 %v1624, %v2256
      %v2258 = vpop.f32.mrf.mxu0
      %v2259 = vadd.f32 %v1624, %v2258
      %2260 = vmatmul.bf16.gmra.mxu0 %v1756
      %v2261 = vpop.f32.mrf.mxu0
      %v2262 = vadd.f32 %v1624, %v2261
      %v2263 = vpop.f32.mrf.mxu0
      %v2264 = vadd.f32 %v1624, %v2263
      %2265 = vmatmul.bf16.gmra.mxu0 %v1765
      %v2266 = vpop.f32.mrf.mxu0
      %v2267 = vadd.f32 %v1624, %v2266
      %v2268 = vpop.f32.mrf.mxu0
      %v2269 = vadd.f32 %v1624, %v2268
      %2270 = vdwg.mxu0
      %2271 = vmatpush.bf16.msra.mxu0 %v2113
      %2272 = vmatpush.bf16.msra.mxu0 %v2112
      %2273 = vmatpush.bf16.msra.mxu0 %v2111
      %2274 = vmatpush.bf16.msra.mxu0 %v2110
      %2275 = vmatpush.bf16.msra.mxu0 %v2109
      %2276 = vmatpush.bf16.msra.mxu0 %v2108
      %2277 = vmatpush.bf16.msra.mxu0 %v2107
      %2278 = vmatpush.bf16.msra.mxu0 %v2106
      %2279 = vmatmul.bf16.gmra.mxu0 %v1739
      %v2280 = vpop.f32.mrf.mxu0
      %v2281 = vadd.f32 %v2252, %v2280
      %v2282 = vpop.f32.mrf.mxu0
      %v2283 = vadd.f32 %v2254, %v2282
      %2284 = vmatmul.bf16.gmra.mxu0 %v1748
      %v2285 = vpop.f32.mrf.mxu0
      %v2286 = vadd.f32 %v2257, %v2285
      %v2287 = vpop.f32.mrf.mxu0
      %v2288 = vadd.f32 %v2259, %v2287
      %2289 = vmatmul.bf16.gmra.mxu0 %v1757
      %v2290 = vpop.f32.mrf.mxu0
      %v2291 = vadd.f32 %v2262, %v2290
      %v2292 = vpop.f32.mrf.mxu0
      %v2293 = vadd.f32 %v2264, %v2292
      %2294 = vmatmul.bf16.gmra.mxu0 %v1766
      %v2295 = vpop.f32.mrf.mxu0
      %v2296 = vadd.f32 %v2267, %v2295
      %v2297 = vpop.f32.mrf.mxu0
      %v2298 = vadd.f32 %v2269, %v2297
      %2299 = vdwg.mxu0
      %2300 = vmatpush.bf16.msra.mxu0 %v2121
      %2301 = vmatpush.bf16.msra.mxu0 %v2120
      %2302 = vmatpush.bf16.msra.mxu0 %v2119
      %2303 = vmatpush.bf16.msra.mxu0 %v2118
      %2304 = vmatpush.bf16.msra.mxu0 %v2117
      %2305 = vmatpush.bf16.msra.mxu0 %v2116
      %2306 = vmatpush.bf16.msra.mxu0 %v2115
      %2307 = vmatpush.bf16.msra.mxu0 %v2114
      %2308 = vmatmul.bf16.gmra.mxu0 %v1740
      %v2309 = vpop.f32.mrf.mxu0
      %v2310 = vadd.f32 %v2281, %v2309
      %v2311 = vpop.f32.mrf.mxu0
      %v2312 = vadd.f32 %v2283, %v2311
      %2313 = vmatmul.bf16.gmra.mxu0 %v1749
      %v2314 = vpop.f32.mrf.mxu0
      %v2315 = vadd.f32 %v2286, %v2314
      %v2316 = vpop.f32.mrf.mxu0
      %v2317 = vadd.f32 %v2288, %v2316
      %2318 = vmatmul.bf16.gmra.mxu0 %v1758
      %v2319 = vpop.f32.mrf.mxu0
      %v2320 = vadd.f32 %v2291, %v2319
      %v2321 = vpop.f32.mrf.mxu0
      %v2322 = vadd.f32 %v2293, %v2321
      %2323 = vmatmul.bf16.gmra.mxu0 %v1767
      %v2324 = vpop.f32.mrf.mxu0
      %v2325 = vadd.f32 %v2296, %v2324
      %v2326 = vpop.f32.mrf.mxu0
      %v2327 = vadd.f32 %v2298, %v2326
      %2328 = vdwg.mxu0
      %2329 = vmatpush.bf16.msra.mxu0 %v2129
      %2330 = vmatpush.bf16.msra.mxu0 %v2128
      %2331 = vmatpush.bf16.msra.mxu0 %v2127
      %2332 = vmatpush.bf16.msra.mxu0 %v2126
      %2333 = vmatpush.bf16.msra.mxu0 %v2125
      %2334 = vmatpush.bf16.msra.mxu0 %v2124
      %2335 = vmatpush.bf16.msra.mxu0 %v2123
      %2336 = vmatpush.bf16.msra.mxu0 %v2122
      %2337 = vmatmul.bf16.gmra.mxu0 %v1741
      %v2338 = vpop.f32.mrf.mxu0
      %v2339 = vadd.f32 %v2310, %v2338
      %v2340 = vpop.f32.mrf.mxu0
      %v2341 = vadd.f32 %v2312, %v2340
      %2342 = vmatmul.bf16.gmra.mxu0 %v1750
      %v2343 = vpop.f32.mrf.mxu0
      %v2344 = vadd.f32 %v2315, %v2343
      %v2345 = vpop.f32.mrf.mxu0
      %v2346 = vadd.f32 %v2317, %v2345
      %2347 = vmatmul.bf16.gmra.mxu0 %v1759
      %v2348 = vpop.f32.mrf.mxu0
      %v2349 = vadd.f32 %v2320, %v2348
      %v2350 = vpop.f32.mrf.mxu0
      %v2351 = vadd.f32 %v2322, %v2350
      %2352 = vmatmul.bf16.gmra.mxu0 %v1768
      %v2353 = vpop.f32.mrf.mxu0
      %v2354 = vadd.f32 %v2325, %v2353
      %v2355 = vpop.f32.mrf.mxu0
      %v2356 = vadd.f32 %v2327, %v2355
      %2357 = vdwg.mxu0
      %2358 = vmatpush.bf16.msra.mxu0 %v2137
      %2359 = vmatpush.bf16.msra.mxu0 %v2136
      %2360 = vmatpush.bf16.msra.mxu0 %v2135
      %2361 = vmatpush.bf16.msra.mxu0 %v2134
      %2362 = vmatpush.bf16.msra.mxu0 %v2133
      %2363 = vmatpush.bf16.msra.mxu0 %v2132
      %2364 = vmatpush.bf16.msra.mxu0 %v2131
      %2365 = vmatpush.bf16.msra.mxu0 %v2130
      %2366 = vmatmul.bf16.gmra.mxu0 %v1742
      %v2367 = vpop.f32.mrf.mxu0
      %v2368 = vadd.f32 %v2339, %v2367
      %v2369 = vpop.f32.mrf.mxu0
      %v2370 = vadd.f32 %v2341, %v2369
      %2371 = vmatmul.bf16.gmra.mxu0 %v1751
      %v2372 = vpop.f32.mrf.mxu0
      %v2373 = vadd.f32 %v2344, %v2372
      %v2374 = vpop.f32.mrf.mxu0
      %v2375 = vadd.f32 %v2346, %v2374
      %2376 = vmatmul.bf16.gmra.mxu0 %v1760
      %v2377 = vpop.f32.mrf.mxu0
      %v2378 = vadd.f32 %v2349, %v2377
      %v2379 = vpop.f32.mrf.mxu0
      %v2380 = vadd.f32 %v2351, %v2379
      %2381 = vmatmul.bf16.gmra.mxu0 %v1769
      %v2382 = vpop.f32.mrf.mxu0
      %v2383 = vadd.f32 %v2354, %v2382
      %v2384 = vpop.f32.mrf.mxu0
      %v2385 = vadd.f32 %v2356, %v2384
      %2386 = vdwg.mxu0
      %2387 = vmatpush.bf16.msra.mxu0 %v2145
      %2388 = vmatpush.bf16.msra.mxu0 %v2144
      %2389 = vmatpush.bf16.msra.mxu0 %v2143
      %2390 = vmatpush.bf16.msra.mxu0 %v2142
      %2391 = vmatpush.bf16.msra.mxu0 %v2141
      %2392 = vmatpush.bf16.msra.mxu0 %v2140
      %2393 = vmatpush.bf16.msra.mxu0 %v2139
      %2394 = vmatpush.bf16.msra.mxu0 %v2138
      %2395 = vmatmul.bf16.gmra.mxu0 %v1743
      %v2396 = vpop.f32.mrf.mxu0
      %v2397 = vadd.f32 %v2368, %v2396
      %v2398 = vpop.f32.mrf.mxu0
      %v2399 = vadd.f32 %v2370, %v2398
      %2400 = vmatmul.bf16.gmra.mxu0 %v1752
      %v2401 = vpop.f32.mrf.mxu0
      %v2402 = vadd.f32 %v2373, %v2401
      %v2403 = vpop.f32.mrf.mxu0
      %v2404 = vadd.f32 %v2375, %v2403
      %2405 = vmatmul.bf16.gmra.mxu0 %v1761
      %v2406 = vpop.f32.mrf.mxu0
      %v2407 = vadd.f32 %v2378, %v2406
      %v2408 = vpop.f32.mrf.mxu0
      %v2409 = vadd.f32 %v2380, %v2408
      %2410 = vmatmul.bf16.gmra.mxu0 %v1770
      %v2411 = vpop.f32.mrf.mxu0
      %v2412 = vadd.f32 %v2383, %v2411
      %v2413 = vpop.f32.mrf.mxu0
      %v2414 = vadd.f32 %v2385, %v2413
      %2415 = vdwg.mxu0
      %2416 = vmatpush.bf16.msra.mxu0 %v2153
      %2417 = vmatpush.bf16.msra.mxu0 %v2152
      %2418 = vmatpush.bf16.msra.mxu0 %v2151
      %2419 = vmatpush.bf16.msra.mxu0 %v2150
      %2420 = vmatpush.bf16.msra.mxu0 %v2149
      %2421 = vmatpush.bf16.msra.mxu0 %v2148
      %2422 = vmatpush.bf16.msra.mxu0 %v2147
      %2423 = vmatpush.bf16.msra.mxu0 %v2146
      %2424 = vmatmul.bf16.gmra.mxu0 %v1744
      %v2425 = vpop.f32.mrf.mxu0
      %v2426 = vadd.f32 %v2397, %v2425
      %v2427 = vpop.f32.mrf.mxu0
      %v2428 = vadd.f32 %v2399, %v2427
      %2429 = vmatmul.bf16.gmra.mxu0 %v1753
      %v2430 = vpop.f32.mrf.mxu0
      %v2431 = vadd.f32 %v2402, %v2430
      %v2432 = vpop.f32.mrf.mxu0
      %v2433 = vadd.f32 %v2404, %v2432
      %2434 = vmatmul.bf16.gmra.mxu0 %v1762
      %v2435 = vpop.f32.mrf.mxu0
      %v2436 = vadd.f32 %v2407, %v2435
      %v2437 = vpop.f32.mrf.mxu0
      %v2438 = vadd.f32 %v2409, %v2437
      %2439 = vmatmul.bf16.gmra.mxu0 %v1771
      %v2440 = vpop.f32.mrf.mxu0
      %v2441 = vadd.f32 %v2412, %v2440
      %v2442 = vpop.f32.mrf.mxu0
      %v2443 = vadd.f32 %v2414, %v2442
      %2444 = vdwg.mxu0
      %2445 = vmatpush.bf16.msra.mxu0 %v2161
      %2446 = vmatpush.bf16.msra.mxu0 %v2160
      %2447 = vmatpush.bf16.msra.mxu0 %v2159
      %2448 = vmatpush.bf16.msra.mxu0 %v2158
      %2449 = vmatpush.bf16.msra.mxu0 %v2157
      %2450 = vmatpush.bf16.msra.mxu0 %v2156
      %2451 = vmatpush.bf16.msra.mxu0 %v2155
      %2452 = vmatpush.bf16.msra.mxu0 %v2154
      %2453 = vmatmul.bf16.gmra.mxu0 %v1745
      %v2454 = vpop.f32.mrf.mxu0
      %v2455 = vadd.f32 %v2426, %v2454
      %v2456 = vpop.f32.mrf.mxu0
      %v2457 = vadd.f32 %v2428, %v2456
      %2458 = vmatmul.bf16.gmra.mxu0 %v1754
      %v2459 = vpop.f32.mrf.mxu0
      %v2460 = vadd.f32 %v2431, %v2459
      %v2461 = vpop.f32.mrf.mxu0
      %v2462 = vadd.f32 %v2433, %v2461
      %2463 = vmatmul.bf16.gmra.mxu0 %v1763
      %v2464 = vpop.f32.mrf.mxu0
      %v2465 = vadd.f32 %v2436, %v2464
      %v2466 = vpop.f32.mrf.mxu0
      %v2467 = vadd.f32 %v2438, %v2466
      %2468 = vmatmul.bf16.gmra.mxu0 %v1772
      %v2469 = vpop.f32.mrf.mxu0
      %v2470 = vadd.f32 %v2441, %v2469
      %v2471 = vpop.f32.mrf.mxu0
      %v2472 = vadd.f32 %v2443, %v2471
      %2473 = vdwg.mxu0
      %2474 = vmatpush.bf16.msra.mxu0 %v2169
      %2475 = vmatpush.bf16.msra.mxu0 %v2168
      %2476 = vmatpush.bf16.msra.mxu0 %v2167
      %2477 = vmatpush.bf16.msra.mxu0 %v2166
      %2478 = vmatpush.bf16.msra.mxu0 %v2165
      %2479 = vmatpush.bf16.msra.mxu0 %v2164
      %2480 = vmatpush.bf16.msra.mxu0 %v2163
      %2481 = vmatpush.bf16.msra.mxu0 %v2162
      %2482 = vmatmul.bf16.gmra.mxu0 %v1746
      %v2483 = vpop.f32.mrf.mxu0
      %v2484 = vadd.f32 %v2455, %v2483
      %v2485 = vpop.f32.mrf.mxu0
      %v2486 = vadd.f32 %v2457, %v2485
      %2487 = vmatmul.bf16.gmra.mxu0 %v1755
      %v2488 = vpop.f32.mrf.mxu0
      %v2489 = vadd.f32 %v2460, %v2488
      %v2490 = vpop.f32.mrf.mxu0
      %v2491 = vadd.f32 %v2462, %v2490
      %2492 = vmatmul.bf16.gmra.mxu0 %v1764
      %v2493 = vpop.f32.mrf.mxu0
      %v2494 = vadd.f32 %v2465, %v2493
      %v2495 = vpop.f32.mrf.mxu0
      %v2496 = vadd.f32 %v2467, %v2495
      %2497 = vmatmul.bf16.gmra.mxu0 %v1773
      %v2498 = vpop.f32.mrf.mxu0
      %v2499 = vadd.f32 %v2470, %v2498
      %v2500 = vpop.f32.mrf.mxu0
      %v2501 = vadd.f32 %v2472, %v2500
      %2502 = vdwg.mxu0
      %v2503 = vpack.c.bf16 %v2484, %v2484
      %v2504 = vpack.c.bf16 %v2486, %v2486
      %v2505 = vpack.c.bf16 %v2489, %v2489
      %v2506 = vpack.c.bf16 %v2491, %v2491
      %v2507 = vpack.c.bf16 %v2494, %v2494
      %v2508 = vpack.c.bf16 %v2496, %v2496
      %v2509 = vpack.c.bf16 %v2499, %v2499
      %v2510 = vpack.c.bf16 %v2501, %v2501
      %2511 = vst [vmem:[%s211] sm:$0xf] %v2503
      %2512 = vst [vmem:[%s211 + $0x4] sm:$0xf] %v2504
      %2513 = vst [vmem:[%s211 + $0x8] sm:$0xf] %v2505
      %2514 = vst [vmem:[%s211 + $0xc] sm:$0xf] %v2506
      %2515 = vst [vmem:[%s211 + $0x10] sm:$0xf] %v2507
      %2516 = vst [vmem:[%s211 + $0x14] sm:$0xf] %v2508
      %2517 = vst [vmem:[%s211 + $0x18] sm:$0xf] %v2509
      %2518 = vst [vmem:[%s211 + $0x1c] sm:$0xf] %v2510
      %s2519 = smul.u32 8, %s19
      %p2520 = scmp.lt.s32.totalorder %s18, 1
      %s2521 = scalar_select %p2520, %s18, 1
      %p2522 = scmp.lt.s32.totalorder %s2519, 7
      %s2523 = scalar_select %p2522, %s2519, 7
      %s2524 = smul.addr %s2521, 8
      %s2525 = sadd.s32 %s2523, %s2524
      %s2526 = smul.addr %s2525, 4
      %s2527 = scalar_lea.vmem %s3, %s2526
      // Predicated region
      $region33: #{downsample_forward.1} parent=31 // pred_check
        %p2528 = pneg %p116
      $region34: #{downsample_forward.1} parent=31 // pred_check_branch
        %2530 = sbr.rel (%p2528) target = $region36
      $region35: #{downsample_forward.1} parent=31 // pred_region
        %s2531 = smul.u32 8, %s19
      $region36: #{downsample_forward.1} parent=31 // pred_fallthru
        _
    $region32: #{downsample_forward.1} parent=5 // pred_fallthru
      _
    %p2532 = scmp.le.s32.totalorder 2, %s9
    // Predicated region
    $region37: #{downsample_forward.1} parent=5 // pred_check
      %p2533 = pneg %p2532
    $region38: #{downsample_forward.1} parent=5 // pred_check_branch
      %2535 = sbr.rel (%p2533) target = $region40
    $region39: #{downsample_forward.1} parent=5 // pred_region
      %s2536 = ssub.s32 %s9, 2
      // Predicated region
      $region41: #{downsample_forward.1} parent=39 // pred_check
        %p2537 = pneg %p122
      $region42: #{downsample_forward.1} parent=39 // pred_check_branch
        %2539 = sbr.rel (%p2537) target = $region44
      $region43: #{downsample_forward.1} parent=39 // pred_region
        %s2540 = smul.u32 8, %s21
        %p2541 = scmp.lt.s32.totalorder %s20, 1
        %s2542 = scalar_select %p2541, %s20, 1
        %p2543 = scmp.lt.s32.totalorder %s2540, 7
        %s2544 = scalar_select %p2543, %s2540, 7
        %s2545 = smul.addr %s2542, 8
        %s2546 = sadd.s32 %s2544, %s2545
        %s2547 = smul.addr %s2546, 4
        %s2548 = scalar_lea.vmem %s3, %s2547
      $region44: #{downsample_forward.1} parent=39 // pred_fallthru
        _
    $region40: #{downsample_forward.1} parent=5 // pred_fallthru
      _
  $region6: #{downsample_forward.1} parent=0 // loop_footer
    %s13 = sadd.s32 1, %s9
  $region7: #{downsample_forward.1} parent=0 // loop_footer_branch
    %8 = sbr.rel target = $region3
  $region8: #{downsample_forward.1} parent=0 // loop_exit
    _

</llo_original>
